<compile_context>
chip_gen: v7x
topology: tpu7x:2x2x1
jax: 0.10.0
libtpu: 0.0.40
codegen_flags: <defaults>
</compile_context>

<pallas_src>
import math

import jax
import jax.numpy as jnp
from jax.experimental import pallas as pl
from jax.experimental.pallas import tpu as pltpu

# ----------------------------- model config (small) -----------------------------
VOCAB = 30
B = 2          # batch
S = 8          # sequence length
H = 32         # hidden size   (real BERT: 768)
NH = 2         # num heads
DH = H // NH   # head dim
FF = 64        # intermediate size
LAYERS = 2
D_MODEL = 2 * H  # output dim of BERTBackbone (cls ++ pooled-mean)

LN_EPS = 1e-12


def _bf16(x):
    return x.astype(jnp.bfloat16)


def _ln(x, g, b, eps=LN_EPS):
    mean = jnp.mean(x, axis=-1, keepdims=True)
    cen = x - mean
    var = jnp.mean(cen * cen, axis=-1, keepdims=True)
    return cen * jax.lax.rsqrt(var + eps) * g + b


# ======================= single fused whole-network kernel =======================
#
# grid = (LAYERS,) "arbitrary".  Activation lives in a VMEM scratch across layers.

def _bert_fused_kernel(emb_ref, mask_k_ref, mask_q_ref, const_ref,
                       wqkv_ref, wo_ref, w1_ref, w2_ref, bias_ref, pw_ref,
                       o_ref, act_ref):
    l = pl.program_id(0)
    n_l = pl.num_programs(0)

    # ---- layer-0 prologue: embedding sum -> LayerNorm into the resident activation
    @pl.when(l == 0)
    def _():
        cp = const_ref[...]                                  # (3, H)
        act_ref[...] = _ln(emb_ref[...], cp[0:1, :], cp[1:2, :])

    x = act_ref[...]                                         # (B*S, H) f32

    # Packed per-layer bias / LN params: (4, 3H) rows =
    #   0: bqkv | 1: [bo, ln1_g, ln1_b] | 2: [b1(FF), b2(H)] | 3: [ln2_g, ln2_b, pad]
    bp = bias_ref[0]
    bqkv = bp[0:1, :]
    bo = bp[1:2, 0:H]
    g1 = bp[1:2, H:2 * H]
    b1 = bp[1:2, 2 * H:3 * H]
    bf1 = bp[2:3, 0:FF]
    bf2 = bp[2:3, FF:FF + H]
    g2 = bp[3:4, 0:H]
    b2 = bp[3:4, H:2 * H]

    # ---- fused QKV projection: one MXU pass (bf16 operands, f32 accumulate).
    # 1/sqrt(DH) is pre-folded into the Q columns of wqkv (init-time preprocessing).
    qkv = jnp.dot(_bf16(x), wqkv_ref[0],
                  preferred_element_type=jnp.float32) + bqkv           # (B*S, 3H)

    keep = mask_k_ref[...] > 0.5                                       # (B, 1, S)

    # ---- attention: per-head (static NH=2 unroll), each head batched over B.
    # Head split stays in lanes; leading-dim reshapes (B*S,DH)->(B,S,DH) are
    # 8-sublane-tile aligned (free), no 4-D transposes needed.
    ctx_heads = []
    for h in range(NH):
        q_h = qkv[:, h * DH:(h + 1) * DH].reshape(B, S, DH)
        k_h = qkv[:, H + h * DH:H + (h + 1) * DH].reshape(B, S, DH)
        v_h = qkv[:, 2 * H + h * DH:2 * H + (h + 1) * DH].reshape(B, S, DH)

        s = jnp.einsum("bqd,bkd->bqk", _bf16(q_h), _bf16(k_h),
                       preferred_element_type=jnp.float32)             # (B, S, S)
        s = jnp.where(keep, s, -1e30)
        m = jnp.max(s, axis=-1, keepdims=True)
        p = jnp.exp(s - m)
        p = p * pl.reciprocal(jnp.sum(p, axis=-1, keepdims=True), approx=True)

        ctx = jnp.einsum("bqk,bkd->bqd", _bf16(p), _bf16(v_h),
                         preferred_element_type=jnp.float32)           # (B, S, DH)
        ctx_heads.append(ctx.reshape(B * S, DH))
    ctx = jnp.concatenate(ctx_heads, axis=-1)                          # (B*S, H)

    # ---- single output projection + residual + LN1
    attn = jnp.dot(_bf16(ctx), wo_ref[0],
                   preferred_element_type=jnp.float32) + bo
    y1 = _ln(x + attn, g1, b1)

    # ---- FFN + residual + LN2
    # TODO(synk): HF BERT uses exact erf-GELU; tanh approximation used here.
    ff = jnp.dot(_bf16(y1), w1_ref[0],
                 preferred_element_type=jnp.float32) + bf1
    ff = jax.nn.gelu(ff, approximate=True)
    ff = jnp.dot(_bf16(ff), w2_ref[0],
                 preferred_element_type=jnp.float32) + bf2
    y2 = _ln(y1 + ff, g2, b2)

    act_ref[...] = y2

    # ---- last-layer epilogue: pooler(tanh on CLS) + universal_sentence_embedding
    @pl.when(l == n_l - 1)
    def _():
        cp = const_ref[...]                                            # (3, H)
        seq = y2.reshape(B, S, H)                                      # (B, S, H)
        cls = seq[:, 0, :]                                             # (B, H)
        pooled = jnp.tanh(
            jnp.dot(_bf16(cls), pw_ref[...],
                    preferred_element_type=jnp.float32) + cp[2:3, :])  # (B, H)

        mq = mask_q_ref[...]                                           # (B, S, 1)
        sums = jnp.sum(seq * mq, axis=1)                               # (B, H) VPU
        cnt = jnp.sum(mq, axis=1)                                      # (B, 1)
        use = sums * jax.lax.rsqrt(jnp.maximum(cnt, 1.0))              # (B, H)

        # Lane-dense store: (1, B*2H) = (1, 128) full-width vst.
        pieces = []
        for b in range(B):
            pieces.append(pooled[b:b + 1, :])
            pieces.append(use[b:b + 1, :])
        o_ref[...] = jnp.concatenate(pieces, axis=-1)                  # (1, B*2H)


def bert_fused(emb, mask_k, mask_q, params):
    out = pl.pallas_call(
        _bert_fused_kernel,
        out_shape=jax.ShapeDtypeStruct((1, 2 * B * H), jnp.float32),
        grid=(LAYERS,),
        in_specs=[
            pl.BlockSpec((B * S, H), lambda l: (0, 0)),          # emb (summed)
            pl.BlockSpec((B, 1, S), lambda l: (0, 0, 0)),        # key mask
            pl.BlockSpec((B, S, 1), lambda l: (0, 0, 0)),        # query/USE mask
            pl.BlockSpec((3, H), lambda l: (0, 0)),              # emb-LN g/b, pooler b
            pl.BlockSpec((1, H, 3 * H), lambda l: (l, 0, 0)),    # wqkv stacked
            pl.BlockSpec((1, H, H), lambda l: (l, 0, 0)),        # wo stacked
            pl.BlockSpec((1, H, FF), lambda l: (l, 0, 0)),       # w1 stacked
            pl.BlockSpec((1, FF, H), lambda l: (l, 0, 0)),       # w2 stacked
            pl.BlockSpec((1, 4, 3 * H), lambda l: (l, 0, 0)),    # packed biases
            pl.BlockSpec((H, H), lambda l: (0, 0)),              # pooler_w
        ],
        out_specs=pl.BlockSpec((1, 2 * B * H), lambda l: (0, 0)),
        scratch_shapes=[pltpu.VMEM((B * S, H), jnp.float32)],    # resident activation
        compiler_params=pltpu.CompilerParams(
            dimension_semantics=("arbitrary",)),                 # sequential layer dep
    )(emb, mask_k, mask_q, params["const"],
      params["wqkv"], params["wo"], params["w1"], params["w2"], params["bias"],
      params["pooler_w"])
    return out.reshape(B, 2 * H)


# ============================== parameter construction ===========================

def init_params(key):
    def nrm(k, shape, scale=0.02):
        return scale * jax.random.normal(k, shape, dtype=jnp.float32)

    keys = jax.random.split(key, 8 + LAYERS)
    word_emb = nrm(keys[0], (VOCAB, H))
    pos_emb = nrm(keys[1], (S, H))
    type_emb = nrm(keys[2], (2, H))

    params = {
        # type-0 embedding folded into the token table (one-time preprocessing)
        "tok_emb": word_emb + type_emb[0][None, :],
        "pos_emb": pos_emb,
        "pooler_w": nrm(keys[3], (H, H)).astype(jnp.bfloat16),   # MXU operand
        # const pack rows: [emb_ln_gamma, emb_ln_beta, pooler_bias]
        "const": jnp.stack([jnp.ones((H,), jnp.float32),
                            jnp.zeros((H,), jnp.float32),
                            jnp.zeros((H,), jnp.float32)]),
    }

    inv = 1.0 / math.sqrt(DH)
    wqkv_l, wo_l, w1_l, w2_l, bias_l = [], [], [], [], []
    for li in range(LAYERS):
        lk = jax.random.split(keys[8 + li], 6)
        wq, wk, wv = nrm(lk[0], (H, H)), nrm(lk[1], (H, H)), nrm(lk[2], (H, H))
        bq = jnp.zeros((H,), jnp.float32)
        bk = jnp.zeros((H,), jnp.float32)
        bv = jnp.zeros((H,), jnp.float32)
        # Q/K/V fused into one (H, 3H) weight, 1/sqrt(DH) folded into Q cols + bias.
        wqkv_l.append(jnp.concatenate([wq * inv, wk, wv], axis=1).astype(jnp.bfloat16))
        bqkv = jnp.concatenate([bq * inv, bk, bv])               # (3H,)
        wo_l.append(nrm(lk[3], (H, H)).astype(jnp.bfloat16))
        w1_l.append(nrm(lk[4], (H, FF)).astype(jnp.bfloat16))
        w2_l.append(nrm(lk[5], (FF, H)).astype(jnp.bfloat16))
        bo = jnp.zeros((H,), jnp.float32)
        g1 = jnp.ones((H,), jnp.float32); b1n = jnp.zeros((H,), jnp.float32)
        bf1 = jnp.zeros((FF,), jnp.float32); bf2 = jnp.zeros((H,), jnp.float32)
        g2 = jnp.ones((H,), jnp.float32); b2n = jnp.zeros((H,), jnp.float32)
        bias_l.append(jnp.stack([
            bqkv,                                                  # row 0
            jnp.concatenate([bo, g1, b1n]),                        # row 1
            jnp.concatenate([bf1, bf2]),                           # row 2 (FF+H = 3H)
            jnp.concatenate([g2, b2n, jnp.zeros((H,), jnp.float32)]),  # row 3
        ]))
    params["wqkv"] = jnp.stack(wqkv_l)                             # (L, H, 3H) bf16
    params["wo"] = jnp.stack(wo_l)                                 # (L, H, H)  bf16
    params["w1"] = jnp.stack(w1_l)                                 # (L, H, FF) bf16
    params["w2"] = jnp.stack(w2_l)                                 # (L, FF, H) bf16
    params["bias"] = jnp.stack(bias_l).astype(jnp.float32)         # (L, 4, 3H) f32
    return params


# ================================= model forward =================================

@jax.jit
def bert_backbone_forward(params, input_ids):
    mask = (input_ids != 0).astype(jnp.float32)                    # (B, S)
    mask_k = mask[:, None, :]                                      # (B, 1, S)
    mask_q = mask[:, :, None]                                      # (B, S, 1)

    # Embedding gather is glue; word+type+position summed here, LayerNorm fused
    # into the kernel under @pl.when(layer == 0).
    # TODO(synk): at real vocab sizes fuse the gather via PrefetchScalarGridSpec.
    emb = jnp.take(params["tok_emb"], input_ids, axis=0) + params["pos_emb"][None]
    emb = emb.reshape(B * S, H)

    return bert_fused(emb, mask_k, mask_q, params)                 # (B, 2H)


# ===================================== main ======================================

if __name__ == "__main__":
    key = jax.random.PRNGKey(0)
    pkey, dkey = jax.random.split(key)
    params = init_params(pkey)

    input_ids = jax.random.randint(dkey, (B, S), 0, VOCAB, dtype=jnp.int32)
    # guarantee a non-pad CLS-like first token (matches real BERT inputs)
    input_ids = input_ids.at[:, 0].set(1)

    out = bert_backbone_forward(params, input_ids)
    out = jax.block_until_ready(out)
    assert out.shape == (B, D_MODEL), out.shape
    assert bool(jnp.isfinite(out).all())
    print("KERNEL_OK")
</pallas_src>

<mosaic_0001>
module attributes {stable_mosaic.version = 11 : i64} {
  func.func @_bert_fused_kernel(%arg0: i32, %arg1: memref<16x32xf32, #tpu.memory_space<vmem>>, %arg2: memref<2x1x8xf32, #tpu.memory_space<vmem>>, %arg3: memref<2x8x1xf32, #tpu.memory_space<vmem>>, %arg4: memref<3x32xf32, #tpu.memory_space<vmem>>, %arg5: memref<1x32x96xbf16, #tpu.memory_space<vmem>>, %arg6: memref<1x32x32xbf16, #tpu.memory_space<vmem>>, %arg7: memref<1x32x64xbf16, #tpu.memory_space<vmem>>, %arg8: memref<1x64x32xbf16, #tpu.memory_space<vmem>>, %arg9: memref<1x4x96xf32, #tpu.memory_space<vmem>>, %arg10: memref<32x32xbf16, #tpu.memory_space<vmem>>, %arg11: memref<1x128xf32, #tpu.memory_space<vmem>>, %arg12: memref<16x32xf32, #tpu.memory_space<vmem>>) attributes {dimension_semantics = [#tpu.dimension_semantics<arbitrary>], iteration_bounds = array<i64: 2>, scalar_prefetch = 0 : i64, scratch_operands = 1 : i64, tpu.core_type = #tpu.core_type<tc>, window_params = [{pipeline_mode = #tpu.pipeline_mode<synchronous>, transform_indices = @transform_0, window_bounds = array<i64: 16, 32>}, {pipeline_mode = #tpu.pipeline_mode<synchronous>, transform_indices = @transform_1, window_bounds = array<i64: 2, 1, 8>}, {pipeline_mode = #tpu.pipeline_mode<synchronous>, transform_indices = @transform_2, window_bounds = array<i64: 2, 8, 1>}, {pipeline_mode = #tpu.pipeline_mode<synchronous>, transform_indices = @transform_3, window_bounds = array<i64: 3, 32>}, {transform_indices = @transform_4, window_bounds = array<i64: 1, 32, 96>}, {transform_indices = @transform_5, window_bounds = array<i64: 1, 32, 32>}, {transform_indices = @transform_6, window_bounds = array<i64: 1, 32, 64>}, {transform_indices = @transform_7, window_bounds = array<i64: 1, 64, 32>}, {transform_indices = @transform_8, window_bounds = array<i64: 1, 4, 96>}, {pipeline_mode = #tpu.pipeline_mode<synchronous>, transform_indices = @transform_9, window_bounds = array<i64: 32, 32>}, {pipeline_mode = #tpu.pipeline_mode<synchronous>, transform_indices = @transform_10, window_bounds = array<i64: 1, 128>}]} {
    %c0_i32 = arith.constant 0 : i32
    %0 = arith.cmpi eq, %arg0, %c0_i32 : i32
    %1 = arith.extui %0 : i1 to i32
    %c0_i32_0 = arith.constant 0 : i32
    %2 = arith.cmpi ne, %1, %c0_i32_0 : i32
    scf.if %2 {
      %c0_51 = arith.constant 0 : index
      %c0_52 = arith.constant 0 : index
      %155 = vector.load %arg4[%c0_51, %c0_52] : memref<3x32xf32, #tpu.memory_space<vmem>>, vector<3x32xf32>
      %c0_53 = arith.constant 0 : index
      %c0_54 = arith.constant 0 : index
      %156 = vector.load %arg1[%c0_53, %c0_54] : memref<16x32xf32, #tpu.memory_space<vmem>>, vector<16x32xf32>
      %157 = vector.extract_strided_slice %155 {offsets = [0, 0], sizes = [1, 32], strides = [1, 1]} : vector<3x32xf32> to vector<1x32xf32>
      %158 = vector.extract_strided_slice %155 {offsets = [1, 0], sizes = [1, 32], strides = [1, 1]} : vector<3x32xf32> to vector<1x32xf32>
      %cst_55 = arith.constant dense<0.000000e+00> : vector<16xf32>
      %159 = vector.multi_reduction <add>, %156, %cst_55 [1] : vector<16x32xf32> to vector<16xf32>
      %160 = vector.shape_cast %159 : vector<16xf32> to vector<16x1xf32>
      %cst_56 = arith.constant 3.200000e+01 : f32
      %161 = vector.broadcast %cst_56 : f32 to vector<16x1xf32>
      %162 = arith.divf %160, %161 : vector<16x1xf32>
      %163 = vector.broadcast %162 : vector<16x1xf32> to vector<16x32xf32>
      %164 = arith.subf %156, %163 : vector<16x32xf32>
      %165 = arith.mulf %164, %164 : vector<16x32xf32>
      %cst_57 = arith.constant dense<0.000000e+00> : vector<16xf32>
      %166 = vector.multi_reduction <add>, %165, %cst_57 [1] : vector<16x32xf32> to vector<16xf32>
      %167 = vector.shape_cast %166 : vector<16xf32> to vector<16x1xf32>
      %cst_58 = arith.constant 3.200000e+01 : f32
      %168 = vector.broadcast %cst_58 : f32 to vector<16x1xf32>
      %169 = arith.divf %167, %168 : vector<16x1xf32>
      %cst_59 = arith.constant 9.99999996E-13 : f32
      %170 = vector.broadcast %cst_59 : f32 to vector<16x1xf32>
      %171 = arith.addf %169, %170 : vector<16x1xf32>
      %172 = math.rsqrt %171 : vector<16x1xf32>
      %173 = vector.broadcast %172 : vector<16x1xf32> to vector<16x32xf32>
      %174 = arith.mulf %164, %173 : vector<16x32xf32>
      %175 = vector.broadcast %157 : vector<1x32xf32> to vector<16x32xf32>
      %176 = arith.mulf %174, %175 : vector<16x32xf32>
      %177 = vector.broadcast %158 : vector<1x32xf32> to vector<16x32xf32>
      %178 = arith.addf %176, %177 : vector<16x32xf32>
      %c0_60 = arith.constant 0 : index
      %c0_61 = arith.constant 0 : index
      %179 = vector.load %arg12[%c0_60, %c0_61] : memref<16x32xf32, #tpu.memory_space<vmem>>, vector<16x32xf32>
      tpu.vector_store %arg12[%c0_60, %c0_61], %178 {strides = array<i32>} : memref<16x32xf32, #tpu.memory_space<vmem>>, vector<16x32xf32>,
    } else {
    }
    %c0 = arith.constant 0 : index
    %c0_1 = arith.constant 0 : index
    %3 = vector.load %arg12[%c0, %c0_1] : memref<16x32xf32, #tpu.memory_space<vmem>>, vector<16x32xf32>
    %c0_2 = arith.constant 0 : index
    %c0_3 = arith.constant 0 : index
    %c0_4 = arith.constant 0 : index
    %4 = vector.load %arg9[%c0_2, %c0_3, %c0_4] : memref<1x4x96xf32, #tpu.memory_space<vmem>>, vector<1x4x96xf32>
    %5 = vector.shape_cast %4 : vector<1x4x96xf32> to vector<4x96xf32>
    %6 = vector.extract_strided_slice %5 {offsets = [0, 0], sizes = [1, 96], strides = [1, 1]} : vector<4x96xf32> to vector<1x96xf32>
    %7 = vector.extract_strided_slice %5 {offsets = [1, 0], sizes = [1, 32], strides = [1, 1]} : vector<4x96xf32> to vector<1x32xf32>
    %8 = vector.extract_strided_slice %5 {offsets = [1, 32], sizes = [1, 32], strides = [1, 1]} : vector<4x96xf32> to vector<1x32xf32>
    %9 = vector.extract_strided_slice %5 {offsets = [1, 64], sizes = [1, 32], strides = [1, 1]} : vector<4x96xf32> to vector<1x32xf32>
    %10 = vector.extract_strided_slice %5 {offsets = [2, 0], sizes = [1, 64], strides = [1, 1]} : vector<4x96xf32> to vector<1x64xf32>
    %11 = vector.extract_strided_slice %5 {offsets = [2, 64], sizes = [1, 32], strides = [1, 1]} : vector<4x96xf32> to vector<1x32xf32>
    %12 = vector.extract_strided_slice %5 {offsets = [3, 0], sizes = [1, 32], strides = [1, 1]} : vector<4x96xf32> to vector<1x32xf32>
    %13 = vector.extract_strided_slice %5 {offsets = [3, 32], sizes = [1, 32], strides = [1, 1]} : vector<4x96xf32> to vector<1x32xf32>
    %14 = arith.truncf %3 : vector<16x32xf32> to vector<16x32xbf16>
    %c0_5 = arith.constant 0 : index
    %c0_6 = arith.constant 0 : index
    %c0_7 = arith.constant 0 : index
    %15 = vector.load %arg5[%c0_5, %c0_6, %c0_7] : memref<1x32x96xbf16, #tpu.memory_space<vmem>>, vector<1x32x96xbf16>
    %16 = vector.shape_cast %15 : vector<1x32x96xbf16> to vector<32x96xbf16>
    %cst = arith.constant dense<0.000000e+00> : vector<16x96xf32>
    %17 = tpu.matmul %14, %16, %cst {dimension_numbers = #tpu.dot_dimension_numbers<[1], [0], [0], [1], [0, 0, 1, 1], [], []>} : vector<16x32xbf16>, vector<32x96xbf16>, vector<16x96xf32> -> vector<16x96xf32>
    %18 = vector.broadcast %6 : vector<1x96xf32> to vector<16x96xf32>
    %19 = arith.addf %17, %18 : vector<16x96xf32>
    %c0_8 = arith.constant 0 : index
    %c0_9 = arith.constant 0 : index
    %c0_10 = arith.constant 0 : index
    %20 = vector.load %arg2[%c0_8, %c0_9, %c0_10] : memref<2x1x8xf32, #tpu.memory_space<vmem>>, vector<2x1x8xf32>
    %cst_11 = arith.constant 5.000000e-01 : f32
    %21 = vector.broadcast %cst_11 : f32 to vector<2x1x8xf32>
    %22 = arith.cmpf ogt, %20, %21 : vector<2x1x8xf32>
    %23 = vector.extract_strided_slice %19 {offsets = [0, 0], sizes = [16, 16], strides = [1, 1]} : vector<16x96xf32> to vector<16x16xf32>
    %24 = vector.shape_cast %23 : vector<16x16xf32> to vector<2x8x16xf32>
    %25 = vector.extract_strided_slice %19 {offsets = [0, 32], sizes = [16, 16], strides = [1, 1]} : vector<16x96xf32> to vector<16x16xf32>
    %26 = vector.shape_cast %25 : vector<16x16xf32> to vector<2x8x16xf32>
    %27 = vector.extract_strided_slice %19 {offsets = [0, 64], sizes = [16, 16], strides = [1, 1]} : vector<16x96xf32> to vector<16x16xf32>
    %28 = vector.shape_cast %27 : vector<16x16xf32> to vector<2x8x16xf32>
    %29 = arith.truncf %24 : vector<2x8x16xf32> to vector<2x8x16xbf16>
    %30 = arith.truncf %26 : vector<2x8x16xf32> to vector<2x8x16xbf16>
    "tpu.trace_start"() <{level = 10 : i32, message = "bqd,bkd->bqk"}> : () -> ()
    %cst_12 = arith.constant dense<0.000000e+00> : vector<2x8x8xf32>
    %31 = tpu.matmul %29, %30, %cst_12 {dimension_numbers = #tpu.dot_dimension_numbers<[2], [2], [1], [1], [0, 0, 0, 1, 1, 1], [0], [0]>} : vector<2x8x16xbf16>, vector<2x8x16xbf16>, vector<2x8x8xf32> -> vector<2x8x8xf32>
    %cst_13 = arith.constant -1.000000e+30 : f32
    "tpu.trace_stop"() : () -> ()
    %32 = vector.shape_cast %22 : vector<2x1x8xi1> to vector<2x1x8xi1>
    %33 = vector.broadcast %32 : vector<2x1x8xi1> to vector<2x8x8xi1>
    %34 = vector.broadcast %cst_13 : f32 to vector<2x8x8xf32>
    %35 = arith.select %33, %31, %34 : vector<2x8x8xi1>, vector<2x8x8xf32>
    %cst_14 = arith.constant dense<0xFF800000> : vector<2x8xf32>
    %36 = vector.multi_reduction <maximumf>, %35, %cst_14 [2] : vector<2x8x8xf32> to vector<2x8xf32>
    %37 = vector.shape_cast %36 : vector<2x8xf32> to vector<2x8x1xf32>
    %38 = vector.broadcast %37 : vector<2x8x1xf32> to vector<2x8x8xf32>
    %39 = arith.subf %35, %38 : vector<2x8x8xf32>
    %40 = math.exp %39 : vector<2x8x8xf32>
    %cst_15 = arith.constant dense<0.000000e+00> : vector<2x8xf32>
    %41 = vector.multi_reduction <add>, %40, %cst_15 [2] : vector<2x8x8xf32> to vector<2x8xf32>
    %42 = vector.shape_cast %41 : vector<2x8xf32> to vector<2x8x1xf32>
    %43 = tpu.reciprocal %42 {approx = true} : vector<2x8x1xf32> -> vector<2x8x1xf32>
    %44 = vector.broadcast %43 : vector<2x8x1xf32> to vector<2x8x8xf32>
    %45 = arith.mulf %40, %44 : vector<2x8x8xf32>
    %46 = arith.truncf %45 : vector<2x8x8xf32> to vector<2x8x8xbf16>
    %47 = arith.truncf %28 : vector<2x8x16xf32> to vector<2x8x16xbf16>
    "tpu.trace_start"() <{level = 10 : i32, message = "bqk,bkd->bqd"}> : () -> ()
    %cst_16 = arith.constant dense<0.000000e+00> : vector<2x8x16xf32>
    %48 = tpu.matmul %46, %47, %cst_16 {dimension_numbers = #tpu.dot_dimension_numbers<[2], [1], [1], [2], [0, 0, 0, 1, 1, 2], [0], [0]>} : vector<2x8x8xbf16>, vector<2x8x16xbf16>, vector<2x8x16xf32> -> vector<2x8x16xf32>
    "tpu.trace_stop"() : () -> ()
    %49 = vector.shape_cast %48 : vector<2x8x16xf32> to vector<16x16xf32>
    %50 = vector.extract_strided_slice %19 {offsets = [0, 16], sizes = [16, 16], strides = [1, 1]} : vector<16x96xf32> to vector<16x16xf32>
    %51 = vector.shape_cast %50 : vector<16x16xf32> to vector<2x8x16xf32>
    %52 = vector.extract_strided_slice %19 {offsets = [0, 48], sizes = [16, 16], strides = [1, 1]} : vector<16x96xf32> to vector<16x16xf32>
    %53 = vector.shape_cast %52 : vector<16x16xf32> to vector<2x8x16xf32>
    %54 = vector.extract_strided_slice %19 {offsets = [0, 80], sizes = [16, 16], strides = [1, 1]} : vector<16x96xf32> to vector<16x16xf32>
    %55 = vector.shape_cast %54 : vector<16x16xf32> to vector<2x8x16xf32>
    %56 = arith.truncf %51 : vector<2x8x16xf32> to vector<2x8x16xbf16>
    %57 = arith.truncf %53 : vector<2x8x16xf32> to vector<2x8x16xbf16>
    "tpu.trace_start"() <{level = 10 : i32, message = "bqd,bkd->bqk"}> : () -> ()
    %cst_17 = arith.constant dense<0.000000e+00> : vector<2x8x8xf32>
    %58 = tpu.matmul %56, %57, %cst_17 {dimension_numbers = #tpu.dot_dimension_numbers<[2], [2], [1], [1], [0, 0, 0, 1, 1, 1], [0], [0]>} : vector<2x8x16xbf16>, vector<2x8x16xbf16>, vector<2x8x8xf32> -> vector<2x8x8xf32>
    %cst_18 = arith.constant -1.000000e+30 : f32
    "tpu.trace_stop"() : () -> ()
    %59 = vector.shape_cast %22 : vector<2x1x8xi1> to vector<2x1x8xi1>
    %60 = vector.broadcast %59 : vector<2x1x8xi1> to vector<2x8x8xi1>
    %61 = vector.broadcast %cst_18 : f32 to vector<2x8x8xf32>
    %62 = arith.select %60, %58, %61 : vector<2x8x8xi1>, vector<2x8x8xf32>
    %cst_19 = arith.constant dense<0xFF800000> : vector<2x8xf32>
    %63 = vector.multi_reduction <maximumf>, %62, %cst_19 [2] : vector<2x8x8xf32> to vector<2x8xf32>
    %64 = vector.shape_cast %63 : vector<2x8xf32> to vector<2x8x1xf32>
    %65 = vector.broadcast %64 : vector<2x8x1xf32> to vector<2x8x8xf32>
    %66 = arith.subf %62, %65 : vector<2x8x8xf32>
    %67 = math.exp %66 : vector<2x8x8xf32>
    %cst_20 = arith.constant dense<0.000000e+00> : vector<2x8xf32>
    %68 = vector.multi_reduction <add>, %67, %cst_20 [2] : vector<2x8x8xf32> to vector<2x8xf32>
    %69 = vector.shape_cast %68 : vector<2x8xf32> to vector<2x8x1xf32>
    %70 = tpu.reciprocal %69 {approx = true} : vector<2x8x1xf32> -> vector<2x8x1xf32>
    %71 = vector.broadcast %70 : vector<2x8x1xf32> to vector<2x8x8xf32>
    %72 = arith.mulf %67, %71 : vector<2x8x8xf32>
    %73 = arith.truncf %72 : vector<2x8x8xf32> to vector<2x8x8xbf16>
    %74 = arith.truncf %55 : vector<2x8x16xf32> to vector<2x8x16xbf16>
    "tpu.trace_start"() <{level = 10 : i32, message = "bqk,bkd->bqd"}> : () -> ()
    %cst_21 = arith.constant dense<0.000000e+00> : vector<2x8x16xf32>
    %75 = tpu.matmul %73, %74, %cst_21 {dimension_numbers = #tpu.dot_dimension_numbers<[2], [1], [1], [2], [0, 0, 0, 1, 1, 2], [0], [0]>} : vector<2x8x8xbf16>, vector<2x8x16xbf16>, vector<2x8x16xf32> -> vector<2x8x16xf32>
    "tpu.trace_stop"() : () -> ()
    %76 = vector.shape_cast %75 : vector<2x8x16xf32> to vector<16x16xf32>
    %77 = tpu.concatenate %49, %76 in 1 : vector<16x16xf32>, vector<16x16xf32> -> vector<16x32xf32>
    %78 = arith.truncf %77 : vector<16x32xf32> to vector<16x32xbf16>
    %c0_22 = arith.constant 0 : index
    %c0_23 = arith.constant 0 : index
    %c0_24 = arith.constant 0 : index
    %79 = vector.load %arg6[%c0_22, %c0_23, %c0_24] : memref<1x32x32xbf16, #tpu.memory_space<vmem>>, vector<1x32x32xbf16>
    %80 = vector.shape_cast %79 : vector<1x32x32xbf16> to vector<32x32xbf16>
    %cst_25 = arith.constant dense<0.000000e+00> : vector<16x32xf32>
    %81 = tpu.matmul %78, %80, %cst_25 {dimension_numbers = #tpu.dot_dimension_numbers<[1], [0], [0], [1], [0, 0, 1, 1], [], []>} : vector<16x32xbf16>, vector<32x32xbf16>, vector<16x32xf32> -> vector<16x32xf32>
    %82 = vector.broadcast %7 : vector<1x32xf32> to vector<16x32xf32>
    %83 = arith.addf %81, %82 : vector<16x32xf32>
    %84 = arith.addf %3, %83 : vector<16x32xf32>
    %cst_26 = arith.constant dense<0.000000e+00> : vector<16xf32>
    %85 = vector.multi_reduction <add>, %84, %cst_26 [1] : vector<16x32xf32> to vector<16xf32>
    %86 = vector.shape_cast %85 : vector<16xf32> to vector<16x1xf32>
    %cst_27 = arith.constant 3.200000e+01 : f32
    %87 = vector.broadcast %cst_27 : f32 to vector<16x1xf32>
    %88 = arith.divf %86, %87 : vector<16x1xf32>
    %89 = vector.broadcast %88 : vector<16x1xf32> to vector<16x32xf32>
    %90 = arith.subf %84, %89 : vector<16x32xf32>
    %91 = arith.mulf %90, %90 : vector<16x32xf32>
    %cst_28 = arith.constant dense<0.000000e+00> : vector<16xf32>
    %92 = vector.multi_reduction <add>, %91, %cst_28 [1] : vector<16x32xf32> to vector<16xf32>
    %93 = vector.shape_cast %92 : vector<16xf32> to vector<16x1xf32>
    %cst_29 = arith.constant 3.200000e+01 : f32
    %94 = vector.broadcast %cst_29 : f32 to vector<16x1xf32>
    %95 = arith.divf %93, %94 : vector<16x1xf32>
    %cst_30 = arith.constant 9.99999996E-13 : f32
    %96 = vector.broadcast %cst_30 : f32 to vector<16x1xf32>
    %97 = arith.addf %95, %96 : vector<16x1xf32>
    %98 = math.rsqrt %97 : vector<16x1xf32>
    %99 = vector.broadcast %98 : vector<16x1xf32> to vector<16x32xf32>
    %100 = arith.mulf %90, %99 : vector<16x32xf32>
    %101 = vector.broadcast %8 : vector<1x32xf32> to vector<16x32xf32>
    %102 = arith.mulf %100, %101 : vector<16x32xf32>
    %103 = vector.broadcast %9 : vector<1x32xf32> to vector<16x32xf32>
    %104 = arith.addf %102, %103 : vector<16x32xf32>
    %105 = arith.truncf %104 : vector<16x32xf32> to vector<16x32xbf16>
    %c0_31 = arith.constant 0 : index
    %c0_32 = arith.constant 0 : index
    %c0_33 = arith.constant 0 : index
    %106 = vector.load %arg7[%c0_31, %c0_32, %c0_33] : memref<1x32x64xbf16, #tpu.memory_space<vmem>>, vector<1x32x64xbf16>
    %107 = vector.shape_cast %106 : vector<1x32x64xbf16> to vector<32x64xbf16>
    %cst_34 = arith.constant dense<0.000000e+00> : vector<16x64xf32>
    %108 = tpu.matmul %105, %107, %cst_34 {dimension_numbers = #tpu.dot_dimension_numbers<[1], [0], [0], [1], [0, 0, 1, 1], [], []>} : vector<16x32xbf16>, vector<32x64xbf16>, vector<16x64xf32> -> vector<16x64xf32>
    %109 = vector.broadcast %10 : vector<1x64xf32> to vector<16x64xf32>
    %110 = arith.addf %108, %109 : vector<16x64xf32>
    %111 = arith.mulf %110, %110 : vector<16x64xf32>
    %112 = arith.mulf %110, %111 : vector<16x64xf32>
    %cst_35 = arith.constant 4.471500e-02 : f32
    %113 = vector.broadcast %cst_35 : f32 to vector<16x64xf32>
    %114 = arith.mulf %113, %112 : vector<16x64xf32>
    %115 = arith.addf %110, %114 : vector<16x64xf32>
    %cst_36 = arith.constant 0.797884583 : f32
    %116 = vector.broadcast %cst_36 : f32 to vector<16x64xf32>
    %117 = arith.mulf %116, %115 : vector<16x64xf32>
    %118 = math.tanh %117 : vector<16x64xf32>
    %cst_37 = arith.constant 1.000000e+00 : f32
    %119 = vector.broadcast %cst_37 : f32 to vector<16x64xf32>
    %120 = arith.addf %119, %118 : vector<16x64xf32>
    %cst_38 = arith.constant 5.000000e-01 : f32
    %121 = vector.broadcast %cst_38 : f32 to vector<16x64xf32>
    %122 = arith.mulf %121, %120 : vector<16x64xf32>
    %123 = arith.mulf %110, %122 : vector<16x64xf32>
    %124 = arith.truncf %123 : vector<16x64xf32> to vector<16x64xbf16>
    %c0_39 = arith.constant 0 : index
    %c0_40 = arith.constant 0 : index
    %c0_41 = arith.constant 0 : index
    %125 = vector.load %arg8[%c0_39, %c0_40, %c0_41] : memref<1x64x32xbf16, #tpu.memory_space<vmem>>, vector<1x64x32xbf16>
    %126 = vector.shape_cast %125 : vector<1x64x32xbf16> to vector<64x32xbf16>
    %cst_42 = arith.constant dense<0.000000e+00> : vector<16x32xf32>
    %127 = tpu.matmul %124, %126, %cst_42 {dimension_numbers = #tpu.dot_dimension_numbers<[1], [0], [0], [1], [0, 0, 1, 1], [], []>} : vector<16x64xbf16>, vector<64x32xbf16>, vector<16x32xf32> -> vector<16x32xf32>
    %128 = vector.broadcast %11 : vector<1x32xf32> to vector<16x32xf32>
    %129 = arith.addf %127, %128 : vector<16x32xf32>
    %130 = arith.addf %104, %129 : vector<16x32xf32>
    %cst_43 = arith.constant dense<0.000000e+00> : vector<16xf32>
    %131 = vector.multi_reduction <add>, %130, %cst_43 [1] : vector<16x32xf32> to vector<16xf32>
    %132 = vector.shape_cast %131 : vector<16xf32> to vector<16x1xf32>
    %cst_44 = arith.constant 3.200000e+01 : f32
    %133 = vector.broadcast %cst_44 : f32 to vector<16x1xf32>
    %134 = arith.divf %132, %133 : vector<16x1xf32>
    %135 = vector.broadcast %134 : vector<16x1xf32> to vector<16x32xf32>
    %136 = arith.subf %130, %135 : vector<16x32xf32>
    %137 = arith.mulf %136, %136 : vector<16x32xf32>
    %cst_45 = arith.constant dense<0.000000e+00> : vector<16xf32>
    %138 = vector.multi_reduction <add>, %137, %cst_45 [1] : vector<16x32xf32> to vector<16xf32>
    %139 = vector.shape_cast %138 : vector<16xf32> to vector<16x1xf32>
    %cst_46 = arith.constant 3.200000e+01 : f32
    %140 = vector.broadcast %cst_46 : f32 to vector<16x1xf32>
    %141 = arith.divf %139, %140 : vector<16x1xf32>
    %cst_47 = arith.constant 9.99999996E-13 : f32
    %142 = vector.broadcast %cst_47 : f32 to vector<16x1xf32>
    %143 = arith.addf %141, %142 : vector<16x1xf32>
    %144 = math.rsqrt %143 : vector<16x1xf32>
    %145 = vector.broadcast %144 : vector<16x1xf32> to vector<16x32xf32>
    %146 = arith.mulf %136, %145 : vector<16x32xf32>
    %147 = vector.broadcast %12 : vector<1x32xf32> to vector<16x32xf32>
    %148 = arith.mulf %146, %147 : vector<16x32xf32>
    %149 = vector.broadcast %13 : vector<1x32xf32> to vector<16x32xf32>
    %150 = arith.addf %148, %149 : vector<16x32xf32>
    %c0_48 = arith.constant 0 : index
    %c0_49 = arith.constant 0 : index
    %151 = vector.load %arg12[%c0_48, %c0_49] : memref<16x32xf32, #tpu.memory_space<vmem>>, vector<16x32xf32>
    tpu.vector_store %arg12[%c0_48, %c0_49], %150 {strides = array<i32>} : memref<16x32xf32, #tpu.memory_space<vmem>>, vector<16x32xf32>,
    %c1_i32 = arith.constant 1 : i32
    %152 = arith.cmpi eq, %arg0, %c1_i32 : i32
    %153 = arith.extui %152 : i1 to i32
    %c0_i32_50 = arith.constant 0 : i32
    %154 = arith.cmpi ne, %153, %c0_i32_50 : i32
    scf.if %154 {
      %c0_51 = arith.constant 0 : index
      %c0_52 = arith.constant 0 : index
      %155 = vector.load %arg4[%c0_51, %c0_52] : memref<3x32xf32, #tpu.memory_space<vmem>>, vector<3x32xf32>
      %156 = vector.shape_cast %150 : vector<16x32xf32> to vector<2x8x32xf32>
      %157 = vector.extract_strided_slice %156 {offsets = [0, 0, 0], sizes = [2, 1, 32], strides = [1, 1, 1]} : vector<2x8x32xf32> to vector<2x1x32xf32>
      %158 = vector.shape_cast %157 : vector<2x1x32xf32> to vector<2x32xf32>
      %159 = arith.truncf %158 : vector<2x32xf32> to vector<2x32xbf16>
      %c0_53 = arith.constant 0 : index
      %c0_54 = arith.constant 0 : index
      %160 = vector.load %arg10[%c0_53, %c0_54] : memref<32x32xbf16, #tpu.memory_space<vmem>>, vector<32x32xbf16>
      %cst_55 = arith.constant dense<0.000000e+00> : vector<2x32xf32>
      %161 = tpu.matmul %159, %160, %cst_55 {dimension_numbers = #tpu.dot_dimension_numbers<[1], [0], [0], [1], [0, 0, 1, 1], [], []>} : vector<2x32xbf16>, vector<32x32xbf16>, vector<2x32xf32> -> vector<2x32xf32>
      %162 = vector.extract_strided_slice %155 {offsets = [2, 0], sizes = [1, 32], strides = [1, 1]} : vector<3x32xf32> to vector<1x32xf32>
      %163 = vector.broadcast %162 : vector<1x32xf32> to vector<2x32xf32>
      %164 = arith.addf %161, %163 : vector<2x32xf32>
      %165 = math.tanh %164 : vector<2x32xf32>
      %c0_56 = arith.constant 0 : index
      %c0_57 = arith.constant 0 : index
      %c0_58 = arith.constant 0 : index
      %166 = vector.load %arg3[%c0_56, %c0_57, %c0_58] : memref<2x8x1xf32, #tpu.memory_space<vmem>>, vector<2x8x1xf32>
      %167 = vector.broadcast %166 : vector<2x8x1xf32> to vector<2x8x32xf32>
      %168 = arith.mulf %156, %167 : vector<2x8x32xf32>
      %cst_59 = arith.constant dense<0.000000e+00> : vector<2x32xf32>
      %169 = vector.multi_reduction <add>, %168, %cst_59 [1] : vector<2x8x32xf32> to vector<2x32xf32>
      %cst_60 = arith.constant dense<0.000000e+00> : vector<2x1xf32>
      %170 = vector.multi_reduction <add>, %166, %cst_60 [1] : vector<2x8x1xf32> to vector<2x1xf32>
      %cst_61 = arith.constant 1.000000e+00 : f32
      %171 = vector.broadcast %cst_61 : f32 to vector<2x1xf32>
      %172 = arith.maximumf %170, %171 : vector<2x1xf32>
      %173 = math.rsqrt %172 : vector<2x1xf32>
      %174 = vector.broadcast %173 : vector<2x1xf32> to vector<2x32xf32>
      %175 = arith.mulf %169, %174 : vector<2x32xf32>
      %176 = vector.extract_strided_slice %165 {offsets = [0, 0], sizes = [1, 32], strides = [1, 1]} : vector<2x32xf32> to vector<1x32xf32>
      %177 = vector.extract_strided_slice %175 {offsets = [0, 0], sizes = [1, 32], strides = [1, 1]} : vector<2x32xf32> to vector<1x32xf32>
      %178 = vector.extract_strided_slice %165 {offsets = [1, 0], sizes = [1, 32], strides = [1, 1]} : vector<2x32xf32> to vector<1x32xf32>
      %179 = vector.extract_strided_slice %175 {offsets = [1, 0], sizes = [1, 32], strides = [1, 1]} : vector<2x32xf32> to vector<1x32xf32>
      %180 = tpu.concatenate %176, %177, %178, %179 in 1 : vector<1x32xf32>, vector<1x32xf32>, vector<1x32xf32>, vector<1x32xf32> -> vector<1x128xf32>
      %c0_62 = arith.constant 0 : index
      %c0_63 = arith.constant 0 : index
      %181 = vector.load %arg11[%c0_62, %c0_63] : memref<1x128xf32, #tpu.memory_space<vmem>>, vector<1x128xf32>
      tpu.vector_store %arg11[%c0_62, %c0_63], %180 {strides = array<i32>} : memref<1x128xf32, #tpu.memory_space<vmem>>, vector<1x128xf32>,
    } else {
    }
    return
  }
  func.func @transform_0(%arg0: i32) -> (i32, i32) {
    %c0_i32 = arith.constant 0 : i32
    %c0_i32_0 = arith.constant 0 : i32
    %c0_i32_1 = arith.constant 0 : i32
    return %c0_i32, %c0_i32_0 : i32, i32
  }
  func.func @transform_1(%arg0: i32) -> (i32, i32, i32) {
    %c0_i32 = arith.constant 0 : i32
    %c0_i32_0 = arith.constant 0 : i32
    %c0_i32_1 = arith.constant 0 : i32
    %c0_i32_2 = arith.constant 0 : i32
    return %c0_i32, %c0_i32_0, %c0_i32_1 : i32, i32, i32
  }
  func.func @transform_2(%arg0: i32) -> (i32, i32, i32) {
    %c0_i32 = arith.constant 0 : i32
    %c0_i32_0 = arith.constant 0 : i32
    %c0_i32_1 = arith.constant 0 : i32
    %c0_i32_2 = arith.constant 0 : i32
    return %c0_i32, %c0_i32_0, %c0_i32_1 : i32, i32, i32
  }
  func.func @transform_3(%arg0: i32) -> (i32, i32) {
    %c0_i32 = arith.constant 0 : i32
    %c0_i32_0 = arith.constant 0 : i32
    %c0_i32_1 = arith.constant 0 : i32
    return %c0_i32, %c0_i32_0 : i32, i32
  }
  func.func @transform_4(%arg0: i32) -> (i32, i32, i32) {
    %c0_i32 = arith.constant 0 : i32
    %c0_i32_0 = arith.constant 0 : i32
    %c0_i32_1 = arith.constant 0 : i32
    return %arg0, %c0_i32, %c0_i32_0 : i32, i32, i32
  }
  func.func @transform_5(%arg0: i32) -> (i32, i32, i32) {
    %c0_i32 = arith.constant 0 : i32
    %c0_i32_0 = arith.constant 0 : i32
    %c0_i32_1 = arith.constant 0 : i32
    return %arg0, %c0_i32, %c0_i32_0 : i32, i32, i32
  }
  func.func @transform_6(%arg0: i32) -> (i32, i32, i32) {
    %c0_i32 = arith.constant 0 : i32
    %c0_i32_0 = arith.constant 0 : i32
    %c0_i32_1 = arith.constant 0 : i32
    return %arg0, %c0_i32, %c0_i32_0 : i32, i32, i32
  }
  func.func @transform_7(%arg0: i32) -> (i32, i32, i32) {
    %c0_i32 = arith.constant 0 : i32
    %c0_i32_0 = arith.constant 0 : i32
    %c0_i32_1 = arith.constant 0 : i32
    return %arg0, %c0_i32, %c0_i32_0 : i32, i32, i32
  }
  func.func @transform_8(%arg0: i32) -> (i32, i32, i32) {
    %c0_i32 = arith.constant 0 : i32
    %c0_i32_0 = arith.constant 0 : i32
    %c0_i32_1 = arith.constant 0 : i32
    return %arg0, %c0_i32, %c0_i32_0 : i32, i32, i32
  }
  func.func @transform_9(%arg0: i32) -> (i32, i32) {
    %c0_i32 = arith.constant 0 : i32
    %c0_i32_0 = arith.constant 0 : i32
    %c0_i32_1 = arith.constant 0 : i32
    return %c0_i32, %c0_i32_0 : i32, i32
  }
  func.func @transform_10(%arg0: i32) -> (i32, i32) {
    %c0_i32 = arith.constant 0 : i32
    %c0_i32_0 = arith.constant 0 : i32
    %c0_i32_1 = arith.constant 0 : i32
    return %c0_i32, %c0_i32_0 : i32, i32
  }
}

</mosaic_0001>

<llo_original>
// kernel: bert_backbone_forward.1
$region0: #{bert_backbone_forward.1}
  #allocation0 [shape = 'u32[]', space=smem, size = 0x4, offset = 0x4, fixed_abs, tag = 'smem constant byte address 0x4 - core index']
  #allocation1 [shape = 'u32[144,128]{1,0:T(1,128)}', space=vmem, size = 0x12000, scoped, tag = 'internal scratch']
  #allocation2 [shape = 'f32[16,32]{1,0:T(8,128)}', space=vmem, size = 0x2000, scoped, tag = 'scratch operand']
  %s0 = inlined_call_operand.vmem [shape: f32[16,32], index: 0, kind: input, shape index: {}]
  %s1 = inlined_call_operand.vmem [shape: f32[2,1,8], index: 1, kind: input, shape index: {}]
  %s2 = inlined_call_operand.vmem [shape: f32[2,8,1], index: 2, kind: input, shape index: {}]
  %s3 = inlined_call_operand.vmem [shape: f32[3,32], index: 3, kind: input, shape index: {}]
  %s4 = inlined_call_operand.vmem [shape: bf16[2,32,96], index: 4, kind: input, shape index: {}]
  %s5 = inlined_call_operand.vmem [shape: bf16[2,32,32], index: 5, kind: input, shape index: {}]
  %s6 = inlined_call_operand.vmem [shape: bf16[2,32,64], index: 6, kind: input, shape index: {}]
  %s7 = inlined_call_operand.vmem [shape: bf16[2,64,32], index: 7, kind: input, shape index: {}]
  %s8 = inlined_call_operand.vmem [shape: f32[2,4,96], index: 8, kind: input, shape index: {}]
  %s9 = inlined_call_operand.vmem [shape: bf16[32,32], index: 9, kind: input, shape index: {}]
  %s10 = inlined_call_operand.vmem [shape: f32[1,128], index: 10, kind: output, shape index: {}]
  %s11 = sld [smem:[#allocation0]]
  $region81: #{bert_backbone_forward.1} parent=0
    _
  %s13 = ssub.s32 1, %s11
  %s14 = scalar_select 0, %s13, %s11
  loop: start=0, step=1, limit=4
  $region2: #{bert_backbone_forward.1} parent=0 // loop_pre_header
    _
  $region3: #{bert_backbone_forward.1} parent=0 // loop_header
    %s16 = sphi 0, %s20
    %p17 = scmp.ge.s32.totalorder %s16, 4
    %s24 = sphi 0, %s24
    %s26 = sphi 0, %s24
    %s27 = sphi 0, %s26
    %s41 = sphi 0, %s27
    %s45 = sphi 0, %s45
    %s47 = sphi 0, %s45
    %s48 = sphi 0, %s47
    %s62 = sphi 0, %s48
    %s66 = sphi 0, %s66
    %s68 = sphi 0, %s66
    %s69 = sphi 0, %s68
    %s83 = sphi 0, %s69
    %s87 = sphi 0, %s87
    %s89 = sphi 0, %s87
    %s90 = sphi 0, %s89
    %s104 = sphi 0, %s90
    %s110 = sphi 0, %s112
    %s113 = sphi 0, %s110
    %s114 = sphi 0, %s113
    %s130 = sphi 0, %s114
    %s136 = sphi 0, %s138
    %s139 = sphi 0, %s136
    %s140 = sphi 0, %s139
    %s156 = sphi 0, %s140
    %s162 = sphi 0, %s164
    %s165 = sphi 0, %s162
    %s166 = sphi 0, %s165
    %s182 = sphi 0, %s166
    %s188 = sphi 0, %s190
    %s191 = sphi 0, %s188
    %s192 = sphi 0, %s191
    %s208 = sphi 0, %s192
    %s214 = sphi 0, %s216
    %s217 = sphi 0, %s214
    %s218 = sphi 0, %s217
    %s234 = sphi 0, %s218
    %s238 = sphi 0, %s238
    %s240 = sphi 0, %s238
    %s241 = sphi 0, %s240
    %s255 = sphi 0, %s241
    %s259 = sphi 0, %s259
    %s261 = sphi 0, %s259
    %s262 = sphi 0, %s261
    %s276 = sphi 0, %s262
  $region4: #{bert_backbone_forward.1} parent=0 // loop_header_branch
    %19 = sbr.rel (%p17) target = $region8
  $region5: #{bert_backbone_forward.1} parent=0 // loop_body
    %s21 = ssub.s32 %s16, 1
    %s22 = ssub.s32 %s16, 2
    %s23 = sadd.s32 %s16, 1
    %s25 = sadd.s32 %s24, 1
    %p28 = scmp.eq.s32.totalorder %s16, 1
    %p29 = scmp.ne.s32.totalorder %s24, %s26
    %p30 = scmp.eq.s32.totalorder %s16, 0
    %p31 = por %p29, %p30
    %p32 = scmp.ne.s32.totalorder %s24, %s26
    %p33 = scmp.eq.s32.totalorder %s21, 1
    %p34 = por %p32, %p33
    %p35 = scmp.ne.s32.totalorder %s26, %s27
    %p36 = scmp.eq.s32.totalorder %s21, 0
    %p37 = por %p35, %p36
    %p38 = scmp.ne.s32.totalorder %s26, %s27
    %p39 = scmp.eq.s32.totalorder %s22, 1
    %p40 = por %p38, %p39
    %p42 = scmp.ne.s32.totalorder %s27, %s41
    %p43 = scmp.eq.s32.totalorder %s22, 0
    %p44 = por %p42, %p43
    %s46 = sadd.s32 %s45, 1
    %p49 = scmp.eq.s32.totalorder %s16, 1
    %p50 = scmp.ne.s32.totalorder %s45, %s47
    %p51 = scmp.eq.s32.totalorder %s16, 0
    %p52 = por %p50, %p51
    %p53 = scmp.ne.s32.totalorder %s45, %s47
    %p54 = scmp.eq.s32.totalorder %s21, 1
    %p55 = por %p53, %p54
    %p56 = scmp.ne.s32.totalorder %s47, %s48
    %p57 = scmp.eq.s32.totalorder %s21, 0
    %p58 = por %p56, %p57
    %p59 = scmp.ne.s32.totalorder %s47, %s48
    %p60 = scmp.eq.s32.totalorder %s22, 1
    %p61 = por %p59, %p60
    %p63 = scmp.ne.s32.totalorder %s48, %s62
    %p64 = scmp.eq.s32.totalorder %s22, 0
    %p65 = por %p63, %p64
    %s67 = sadd.s32 %s66, 1
    %p70 = scmp.eq.s32.totalorder %s16, 1
    %p71 = scmp.ne.s32.totalorder %s66, %s68
    %p72 = scmp.eq.s32.totalorder %s16, 0
    %p73 = por %p71, %p72
    %p74 = scmp.ne.s32.totalorder %s66, %s68
    %p75 = scmp.eq.s32.totalorder %s21, 1
    %p76 = por %p74, %p75
    %p77 = scmp.ne.s32.totalorder %s68, %s69
    %p78 = scmp.eq.s32.totalorder %s21, 0
    %p79 = por %p77, %p78
    %p80 = scmp.ne.s32.totalorder %s68, %s69
    %p81 = scmp.eq.s32.totalorder %s22, 1
    %p82 = por %p80, %p81
    %p84 = scmp.ne.s32.totalorder %s69, %s83
    %p85 = scmp.eq.s32.totalorder %s22, 0
    %p86 = por %p84, %p85
    %s88 = sadd.s32 %s87, 1
    %p91 = scmp.eq.s32.totalorder %s16, 1
    %p92 = scmp.ne.s32.totalorder %s87, %s89
    %p93 = scmp.eq.s32.totalorder %s16, 0
    %p94 = por %p92, %p93
    %p95 = scmp.ne.s32.totalorder %s87, %s89
    %p96 = scmp.eq.s32.totalorder %s21, 1
    %p97 = por %p95, %p96
    %p98 = scmp.ne.s32.totalorder %s89, %s90
    %p99 = scmp.eq.s32.totalorder %s21, 0
    %p100 = por %p98, %p99
    %p101 = scmp.ne.s32.totalorder %s89, %s90
    %p102 = scmp.eq.s32.totalorder %s22, 1
    %p103 = por %p101, %p102
    %p105 = scmp.ne.s32.totalorder %s90, %s104
    %p106 = scmp.eq.s32.totalorder %s22, 0
    %p107 = por %p105, %p106
    %s108 = ssub.s32 %s16, %s23
    %p109 = scmp.eq.s32.totalorder %s108, 0
    %s111 = sadd.s32 %s110, 1
    %s112 = scalar_select %p109, %s110, %s111
    %p115 = pneg %p109
    %p116 = scmp.eq.s32.totalorder %s16, 1
    %p117 = por %p115, %p116
    %p118 = scmp.ne.s32.totalorder %s110, %s113
    %p119 = scmp.eq.s32.totalorder %s16, 0
    %p120 = por %p118, %p119
    %p121 = scmp.ne.s32.totalorder %s110, %s113
    %p122 = scmp.eq.s32.totalorder %s21, 1
    %p123 = por %p121, %p122
    %p124 = scmp.ne.s32.totalorder %s113, %s114
    %p125 = scmp.eq.s32.totalorder %s21, 0
    %p126 = por %p124, %p125
    %p127 = scmp.ne.s32.totalorder %s113, %s114
    %p128 = scmp.eq.s32.totalorder %s22, 1
    %p129 = por %p127, %p128
    %p131 = scmp.ne.s32.totalorder %s114, %s130
    %p132 = scmp.eq.s32.totalorder %s22, 0
    %p133 = por %p131, %p132
    %s134 = ssub.s32 %s16, %s23
    %p135 = scmp.eq.s32.totalorder %s134, 0
    %s137 = sadd.s32 %s136, 1
    %s138 = scalar_select %p135, %s136, %s137
    %p141 = pneg %p135
    %p142 = scmp.eq.s32.totalorder %s16, 1
    %p143 = por %p141, %p142
    %p144 = scmp.ne.s32.totalorder %s136, %s139
    %p145 = scmp.eq.s32.totalorder %s16, 0
    %p146 = por %p144, %p145
    %p147 = scmp.ne.s32.totalorder %s136, %s139
    %p148 = scmp.eq.s32.totalorder %s21, 1
    %p149 = por %p147, %p148
    %p150 = scmp.ne.s32.totalorder %s139, %s140
    %p151 = scmp.eq.s32.totalorder %s21, 0
    %p152 = por %p150, %p151
    %p153 = scmp.ne.s32.totalorder %s139, %s140
    %p154 = scmp.eq.s32.totalorder %s22, 1
    %p155 = por %p153, %p154
    %p157 = scmp.ne.s32.totalorder %s140, %s156
    %p158 = scmp.eq.s32.totalorder %s22, 0
    %p159 = por %p157, %p158
    %s160 = ssub.s32 %s16, %s23
    %p161 = scmp.eq.s32.totalorder %s160, 0
    %s163 = sadd.s32 %s162, 1
    %s164 = scalar_select %p161, %s162, %s163
    %p167 = pneg %p161
    %p168 = scmp.eq.s32.totalorder %s16, 1
    %p169 = por %p167, %p168
    %p170 = scmp.ne.s32.totalorder %s162, %s165
    %p171 = scmp.eq.s32.totalorder %s16, 0
    %p172 = por %p170, %p171
    %p173 = scmp.ne.s32.totalorder %s162, %s165
    %p174 = scmp.eq.s32.totalorder %s21, 1
    %p175 = por %p173, %p174
    %p176 = scmp.ne.s32.totalorder %s165, %s166
    %p177 = scmp.eq.s32.totalorder %s21, 0
    %p178 = por %p176, %p177
    %p179 = scmp.ne.s32.totalorder %s165, %s166
    %p180 = scmp.eq.s32.totalorder %s22, 1
    %p181 = por %p179, %p180
    %p183 = scmp.ne.s32.totalorder %s166, %s182
    %p184 = scmp.eq.s32.totalorder %s22, 0
    %p185 = por %p183, %p184
    %s186 = ssub.s32 %s16, %s23
    %p187 = scmp.eq.s32.totalorder %s186, 0
    %s189 = sadd.s32 %s188, 1
    %s190 = scalar_select %p187, %s188, %s189
    %p193 = pneg %p187
    %p194 = scmp.eq.s32.totalorder %s16, 1
    %p195 = por %p193, %p194
    %p196 = scmp.ne.s32.totalorder %s188, %s191
    %p197 = scmp.eq.s32.totalorder %s16, 0
    %p198 = por %p196, %p197
    %p199 = scmp.ne.s32.totalorder %s188, %s191
    %p200 = scmp.eq.s32.totalorder %s21, 1
    %p201 = por %p199, %p200
    %p202 = scmp.ne.s32.totalorder %s191, %s192
    %p203 = scmp.eq.s32.totalorder %s21, 0
    %p204 = por %p202, %p203
    %p205 = scmp.ne.s32.totalorder %s191, %s192
    %p206 = scmp.eq.s32.totalorder %s22, 1
    %p207 = por %p205, %p206
    %p209 = scmp.ne.s32.totalorder %s192, %s208
    %p210 = scmp.eq.s32.totalorder %s22, 0
    %p211 = por %p209, %p210
    %s212 = ssub.s32 %s16, %s23
    %p213 = scmp.eq.s32.totalorder %s212, 0
    %s215 = sadd.s32 %s214, 1
    %s216 = scalar_select %p213, %s214, %s215
    %p219 = pneg %p213
    %p220 = scmp.eq.s32.totalorder %s16, 1
    %p221 = por %p219, %p220
    %p222 = scmp.ne.s32.totalorder %s214, %s217
    %p223 = scmp.eq.s32.totalorder %s16, 0
    %p224 = por %p222, %p223
    %p225 = scmp.ne.s32.totalorder %s214, %s217
    %p226 = scmp.eq.s32.totalorder %s21, 1
    %p227 = por %p225, %p226
    %p228 = scmp.ne.s32.totalorder %s217, %s218
    %p229 = scmp.eq.s32.totalorder %s21, 0
    %p230 = por %p228, %p229
    %p231 = scmp.ne.s32.totalorder %s217, %s218
    %p232 = scmp.eq.s32.totalorder %s22, 1
    %p233 = por %p231, %p232
    %p235 = scmp.ne.s32.totalorder %s218, %s234
    %p236 = scmp.eq.s32.totalorder %s22, 0
    %p237 = por %p235, %p236
    %s239 = sadd.s32 %s238, 1
    %p242 = scmp.eq.s32.totalorder %s16, 1
    %p243 = scmp.ne.s32.totalorder %s238, %s240
    %p244 = scmp.eq.s32.totalorder %s16, 0
    %p245 = por %p243, %p244
    %p246 = scmp.ne.s32.totalorder %s238, %s240
    %p247 = scmp.eq.s32.totalorder %s21, 1
    %p248 = por %p246, %p247
    %p249 = scmp.ne.s32.totalorder %s240, %s241
    %p250 = scmp.eq.s32.totalorder %s21, 0
    %p251 = por %p249, %p250
    %p252 = scmp.ne.s32.totalorder %s240, %s241
    %p253 = scmp.eq.s32.totalorder %s22, 1
    %p254 = por %p252, %p253
    %p256 = scmp.ne.s32.totalorder %s241, %s255
    %p257 = scmp.eq.s32.totalorder %s22, 0
    %p258 = por %p256, %p257
    %s260 = sadd.s32 %s259, 1
    %p263 = scmp.eq.s32.totalorder %s16, 1
    %p264 = scmp.ne.s32.totalorder %s259, %s261
    %p265 = scmp.eq.s32.totalorder %s16, 0
    %p266 = por %p264, %p265
    %p267 = scmp.ne.s32.totalorder %s259, %s261
    %p268 = scmp.eq.s32.totalorder %s21, 1
    %p269 = por %p267, %p268
    %p270 = scmp.ne.s32.totalorder %s261, %s262
    %p271 = scmp.eq.s32.totalorder %s21, 0
    %p272 = por %p270, %p271
    %p273 = scmp.ne.s32.totalorder %s261, %s262
    %p274 = scmp.eq.s32.totalorder %s22, 1
    %p275 = por %p273, %p274
    %p277 = scmp.ne.s32.totalorder %s262, %s276
    %p278 = scmp.eq.s32.totalorder %s22, 0
    %p279 = por %p277, %p278
    %p280 = scmp.le.s32.totalorder 1, %s16
    %p281 = scmp.lt.s32.totalorder %s16, 3
    %p282 = pnand %p280, %p281
    %p283 = pneg %p282
    // Predicated region
    $region9: #{bert_backbone_forward.1} parent=5 // pred_check
      _
    $region10: #{bert_backbone_forward.1} parent=5 // pred_check_branch
      %285 = sbr.rel (%p282) target = $region12
    $region11: #{bert_backbone_forward.1} parent=5 // pred_region
      %s286 = ssub.s32 %s16, 1
      // Predicated region
      $region13: #{bert_backbone_forward.1} parent=11 // pred_check
        %p287 = pneg %p37
      $region14: #{bert_backbone_forward.1} parent=11 // pred_check_branch
        %289 = sbr.rel (%p287) target = $region16
      $region15: #{bert_backbone_forward.1} parent=11 // pred_region
        _
      $region16: #{bert_backbone_forward.1} parent=11 // pred_fallthru
        _
      // Predicated region
      $region17: #{bert_backbone_forward.1} parent=11 // pred_check
        %p290 = pneg %p58
      $region18: #{bert_backbone_forward.1} parent=11 // pred_check_branch
        %292 = sbr.rel (%p290) target = $region20
      $region19: #{bert_backbone_forward.1} parent=11 // pred_region
        _
      $region20: #{bert_backbone_forward.1} parent=11 // pred_fallthru
        _
      // Predicated region
      $region21: #{bert_backbone_forward.1} parent=11 // pred_check
        %p293 = pneg %p79
      $region22: #{bert_backbone_forward.1} parent=11 // pred_check_branch
        %295 = sbr.rel (%p293) target = $region24
      $region23: #{bert_backbone_forward.1} parent=11 // pred_region
        _
      $region24: #{bert_backbone_forward.1} parent=11 // pred_fallthru
        _
      // Predicated region
      $region25: #{bert_backbone_forward.1} parent=11 // pred_check
        %p296 = pneg %p100
      $region26: #{bert_backbone_forward.1} parent=11 // pred_check_branch
        %298 = sbr.rel (%p296) target = $region28
      $region27: #{bert_backbone_forward.1} parent=11 // pred_region
        _
      $region28: #{bert_backbone_forward.1} parent=11 // pred_fallthru
        _
      // Predicated region
      $region29: #{bert_backbone_forward.1} parent=11 // pred_check
        %p299 = pneg %p251
      $region30: #{bert_backbone_forward.1} parent=11 // pred_check_branch
        %301 = sbr.rel (%p299) target = $region32
      $region31: #{bert_backbone_forward.1} parent=11 // pred_region
        _
      $region32: #{bert_backbone_forward.1} parent=11 // pred_fallthru
        _
    $region12: #{bert_backbone_forward.1} parent=5 // pred_fallthru
      _
    %p302 = scmp.lt.s32.totalorder %s16, 2
    // Predicated region
    $region33: #{bert_backbone_forward.1} parent=5 // pred_check
      %p303 = pneg %p302
    $region34: #{bert_backbone_forward.1} parent=5 // pred_check_branch
      %305 = sbr.rel (%p303) target = $region36
    $region35: #{bert_backbone_forward.1} parent=5 // pred_region
      // Predicated region
      $region37: #{bert_backbone_forward.1} parent=35 // pred_check
        %p306 = pneg %p120
      $region38: #{bert_backbone_forward.1} parent=35 // pred_check_branch
        %308 = sbr.rel (%p306) target = $region40
      $region39: #{bert_backbone_forward.1} parent=35 // pred_region
        %p309 = scmp.lt.s32.totalorder %s16, 1
        %s310 = scalar_select %p309, %s16, 1
        %s311 = smul.addr %s310, 4
        %s312 = smul.addr %s311, 4
        %s313 = scalar_lea.vmem %s4, %s312
      $region40: #{bert_backbone_forward.1} parent=35 // pred_fallthru
        _
      // Predicated region
      $region41: #{bert_backbone_forward.1} parent=35 // pred_check
        %p314 = pneg %p146
      $region42: #{bert_backbone_forward.1} parent=35 // pred_check_branch
        %316 = sbr.rel (%p314) target = $region44
      $region43: #{bert_backbone_forward.1} parent=35 // pred_region
        %p317 = scmp.lt.s32.totalorder %s16, 1
        %s318 = scalar_select %p317, %s16, 1
        %s319 = smul.addr %s318, 4
        %s320 = smul.addr %s319, 4
        %s321 = scalar_lea.vmem %s5, %s320
      $region44: #{bert_backbone_forward.1} parent=35 // pred_fallthru
        _
      // Predicated region
      $region45: #{bert_backbone_forward.1} parent=35 // pred_check
        %p322 = pneg %p172
      $region46: #{bert_backbone_forward.1} parent=35 // pred_check_branch
        %324 = sbr.rel (%p322) target = $region48
      $region47: #{bert_backbone_forward.1} parent=35 // pred_region
        %p325 = scmp.lt.s32.totalorder %s16, 1
        %s326 = scalar_select %p325, %s16, 1
        %s327 = smul.addr %s326, 4
        %s328 = smul.addr %s327, 4
        %s329 = scalar_lea.vmem %s6, %s328
      $region48: #{bert_backbone_forward.1} parent=35 // pred_fallthru
        _
      // Predicated region
      $region49: #{bert_backbone_forward.1} parent=35 // pred_check
        %p330 = pneg %p198
      $region50: #{bert_backbone_forward.1} parent=35 // pred_check_branch
        %332 = sbr.rel (%p330) target = $region52
      $region51: #{bert_backbone_forward.1} parent=35 // pred_region
        %p333 = scmp.lt.s32.totalorder %s16, 1
        %s334 = scalar_select %p333, %s16, 1
        %s335 = smul.addr %s334, 8
        %s336 = smul.addr %s335, 4
        %s337 = scalar_lea.vmem %s7, %s336
      $region52: #{bert_backbone_forward.1} parent=35 // pred_fallthru
        _
      // Predicated region
      $region53: #{bert_backbone_forward.1} parent=35 // pred_check
        %p338 = pneg %p224
      $region54: #{bert_backbone_forward.1} parent=35 // pred_check_branch
        %340 = sbr.rel (%p338) target = $region56
      $region55: #{bert_backbone_forward.1} parent=35 // pred_region
        %p341 = scmp.lt.s32.totalorder %s16, 1
        %s342 = scalar_select %p341, %s16, 1
        %s343 = smul.addr %s342, 4
        %s344 = scalar_lea.vmem %s8, %s343
      $region56: #{bert_backbone_forward.1} parent=35 // pred_fallthru
        _
    $region36: #{bert_backbone_forward.1} parent=5 // pred_fallthru
      _
    %p345 = scmp.le.s32.totalorder 1, %s16
    %p346 = scmp.lt.s32.totalorder %s16, 3
    %p347 = pnand %p345, %p346
    %p348 = pneg %p347
    // Predicated region
    $region57: #{bert_backbone_forward.1} parent=5 // pred_check
      _
    $region58: #{bert_backbone_forward.1} parent=5 // pred_check_branch
      %350 = sbr.rel (%p347) target = $region60
    $region59: #{bert_backbone_forward.1} parent=5 // pred_region
      %s351 = ssub.s32 %s16, 1
      %p352 = pneg %p37
      %p353 = pneg %p34
      %p354 = pneg %p58
      %p355 = pneg %p55
      %p356 = pneg %p79
      %p357 = pneg %p76
      %p358 = pneg %p100
      %p359 = pneg %p97
      %p360 = scmp.lt.s32.totalorder %s21, 1
      %s361 = scalar_select %p360, %s21, 1
      %s362 = smul.addr %s361, 4
      %s363 = smul.addr %s362, 4
      %s364 = scalar_lea.vmem %s4, %s363
      %p365 = pneg %p126
      %p366 = pneg %p123
      %p367 = scmp.lt.s32.totalorder %s21, 1
      %s368 = scalar_select %p367, %s21, 1
      %s369 = smul.addr %s368, 4
      %s370 = smul.addr %s369, 4
      %s371 = scalar_lea.vmem %s5, %s370
      %p372 = pneg %p152
      %p373 = pneg %p149
      %p374 = scmp.lt.s32.totalorder %s21, 1
      %s375 = scalar_select %p374, %s21, 1
      %s376 = smul.addr %s375, 4
      %s377 = smul.addr %s376, 4
      %s378 = scalar_lea.vmem %s6, %s377
      %p379 = pneg %p178
      %p380 = pneg %p175
      %p381 = scmp.lt.s32.totalorder %s21, 1
      %s382 = scalar_select %p381, %s21, 1
      %s383 = smul.addr %s382, 8
      %s384 = smul.addr %s383, 4
      %s385 = scalar_lea.vmem %s7, %s384
      %p386 = pneg %p204
      %p387 = pneg %p201
      %p388 = scmp.lt.s32.totalorder %s21, 1
      %s389 = scalar_select %p388, %s21, 1
      %s390 = smul.addr %s389, 4
      %s391 = scalar_lea.vmem %s8, %s390
      %p392 = pneg %p230
      %p393 = pneg %p227
      %p394 = pneg %p251
      %p395 = pneg %p248
      %p396 = pneg %p272
      %p397 = pneg %p269
      %p398 = scmp.lt.s32.totalorder %s21, 1
      %s399 = scalar_select %p398, %s21, 1
      %s400 = smul.addr %s399, 4
      %s401 = smul.addr %s400, 4
      %s402 = scalar_lea.vmem %s4, %s401
      %p403 = scmp.lt.s32.totalorder %s21, 1
      %s404 = scalar_select %p403, %s21, 1
      %s405 = smul.addr %s404, 4
      %s406 = smul.addr %s405, 4
      %s407 = scalar_lea.vmem %s5, %s406
      %p408 = scmp.lt.s32.totalorder %s21, 1
      %s409 = scalar_select %p408, %s21, 1
      %s410 = smul.addr %s409, 4
      %s411 = smul.addr %s410, 4
      %s412 = scalar_lea.vmem %s6, %s411
      %p413 = scmp.lt.s32.totalorder %s21, 1
      %s414 = scalar_select %p413, %s21, 1
      %s415 = smul.addr %s414, 8
      %s416 = smul.addr %s415, 4
      %s417 = scalar_lea.vmem %s7, %s416
      %p418 = scmp.lt.s32.totalorder %s21, 1
      %s419 = scalar_select %p418, %s21, 1
      %s420 = smul.addr %s419, 4
      %s421 = scalar_lea.vmem %s8, %s420
      %p423 = scmp.eq.s32.totalorder %s21, 0
      // Predicated region
      $region61: #{bert_backbone_forward.1} parent=59 // pred_check
        %p424 = pneg %p423
      $region62: #{bert_backbone_forward.1} parent=59 // pred_check_branch
        %426 = sbr.rel (%p424) target = $region64
      $region63: #{bert_backbone_forward.1} parent=59 // pred_region
        %v427 = vld [vmem:[%s3] sm:$0x7]
        %v428 = vld [vmem:[%s0] sm:$0xff]
        %v429 = vld [vmem:[%s0 + $0x8] sm:$0xff]
        %vm430 = vcmask 261120
        %v431 = vsel %vm430, %v428, 0.0
        %432 = vadd.xlane.f32.xlu0 %v431
        %v433 = vpop.xlane.xlu0 %432
        %v434 = vsel %vm430, %v429, 0.0
        %435 = vadd.xlane.f32.xlu0 %v434
        %v436 = vpop.xlane.xlu0 %435
        %v437 = vrcp.pop 32.0
        %v438 = vmul.f32 %v433, %v437
        %v439 = vmul.f32 %v436, %v437
        %v440 = vsub.f32 %v428, %v438
        %v441 = vsub.f32 %v429, %v439
        %v442 = vmul.f32 %v440, %v440
        %v443 = vmul.f32 %v441, %v441
        %v444 = vsel %vm430, %v442, 0.0
        %445 = vadd.xlane.f32.xlu0 %v444
        %v446 = vpop.xlane.xlu0 %445
        %v447 = vsel %vm430, %v443, 0.0
        %448 = vadd.xlane.f32.xlu0 %v447
        %v449 = vpop.xlane.xlu0 %448
        %v450 = vmul.f32 %v446, %v437
        %v451 = vmul.f32 %v449, %v437
        %v452 = vadd.f32 %v450, 1e-12
        %v453 = vadd.f32 %v451, 1e-12
        %v454 = vrsqrt.pop %v452
        %v455 = vrsqrt.pop %v453
        %v456 = vmul.f32 %v440, %v454
        %v457 = vmul.f32 %v441, %v455
        %v458 = vlaneseq
        %v459 = vshrl.u32 %v458, 7
        %v460 = vsub.s32 0, %v459
        %v461 = vrot.slane %v427, %v460
        %v462 = vmul.f32 %v456, %v461
        %v463 = vmul.f32 %v457, %v461
        %v464 = vlaneseq
        %v465 = vshrl.u32 %v464, 7
        %v466 = vsub.s32 1, %v465
        %v467 = vrot.slane %v427, %v466
        %v468 = vadd.f32 %v462, %v467
        %v469 = vadd.f32 %v463, %v467
        %470 = vst.msk [vmem:[#allocation2] sm:$0xff] %vm430, %v468
        %471 = vst.msk [vmem:[#allocation2 + $0x8] sm:$0xff] %vm430, %v469
      $region64: #{bert_backbone_forward.1} parent=59 // pred_fallthru
        _
      %v472 = vld [vmem:[#allocation2] sm:$0xff]
      %v473 = vld [vmem:[#allocation2 + $0x8] sm:$0xff]
      %v474 = vld [vmem:[%s421] sm:$0xf]
      %v475 = vpack.c.bf16 %v473, %v472
      %v476 = vld [vmem:[%s402] sm:$0xf]
      %v477 = vld [vmem:[%s402 + $0x4] sm:$0xf]
      %v478 = vld [vmem:[%s402 + $0x8] sm:$0xf]
      %v479 = vld [vmem:[%s402 + $0xc] sm:$0xf]
      %v480 = vlaneseq
      %v481 = vshrl.u32 %v480, 7
      %v482 = vsub.s32 0, %v481
      %v483 = vrot.slane %v474, %v482
      %v488 = vunpack.c.l.b16 %v476
      %v489 = vunpack.c.l.b16 %v477
      %v490 = vunpack.c.l.b16 %v478
      %v491 = vunpack.c.l.b16 %v479
      %v492 = vpack.c.b16 %v489, %v488
      %v493 = vpack.c.b16 %v491, %v490
      %vm496 = vcmask 261120
      %v498 = vsel %vm496, %v475, 0
      %500 = vmatprep.subr.bf16.mxu0 0
      %501 = vmatpush1.bf16.msra.mxu0 %v492
      %502 = vmatprep.subr.bf16.mxu0 0
      %503 = vmatpush1.bf16.msra.mxu0 %v493
      %504 = vmatprep.subr.bf16.mxu0 0
      %505 = vmatpush1.bf16.msra.mxu0 0
      %506 = vmatprep.subr.bf16.mxu0 0
      %507 = vmatpush1.bf16.msra.mxu0 0
      %508 = vmatprep.subr.bf16.mxu0 0
      %509 = vmatpush1.bf16.msra.mxu0 0
      %510 = vmatprep.subr.bf16.mxu0 0
      %511 = vmatpush1.bf16.msra.mxu0 0
      %512 = vmatprep.subr.bf16.mxu0 0
      %513 = vmatpush1.bf16.msra.mxu0 0
      %514 = vmatprep.subr.bf16.mxu0 0
      %515 = vmatpush1.bf16.msra.mxu0 0
      %516 = vmatprep.subr.bf16.mxu0 0
      %517 = vmatpush1.bf16.msra.mxu0 0
      %518 = vmatprep.subr.bf16.mxu0 0
      %519 = vmatpush1.bf16.msra.mxu0 0
      %520 = vmatprep.subr.bf16.mxu0 0
      %521 = vmatpush1.bf16.msra.mxu0 0
      %522 = vmatprep.subr.bf16.mxu0 0
      %523 = vmatpush1.bf16.msra.mxu0 0
      %524 = vmatprep.subr.bf16.mxu0 0
      %525 = vmatpush1.bf16.msra.mxu0 0
      %526 = vmatprep.subr.bf16.mxu0 0
      %527 = vmatpush1.bf16.msra.mxu0 0
      %528 = vmatprep.subr.bf16.mxu0 0
      %529 = vmatpush1.bf16.msra.mxu0 0
      %530 = vmatprep.subr.bf16.mxu0 0
      %531 = vmatpush1.bf16.msra.mxu0 0
      %532 = vmatprep.mubr.bf16.mxu0 0
      %533 = vmatmul.mubr.bf16.gmra.mrb[0].mxu0 %v498
      %v534 = vpop.f32.mrb[0].mxu0
      %v535 = vadd.f32 %v483, %v534
      %v536 = vpop.f32.mrb[0].mxu0
      %v537 = vpop.f32.mrb[0].mxu0
      %v538 = vadd.f32 %v483, %v537
      %v539 = vpop.f32.mrb[0].mxu0
      %540 = vdwg.mxu0
      %v541 = vld [vmem:[%s1] sm:$0x1]
      %v542 = vld [vmem:[%s1 + $0x1] sm:$0x1]
      %vm543 = vcmp.gt.f32.partialorder %v541, 0.5
      %vm544 = vcmp.gt.f32.partialorder %v542, 0.5
      %v545 = vpack.c.bf16 %v535, %v535
      %v546 = vpack.c.bf16 %v538, %v538
      %548 = vrot.lane.b32.xlu0 %v545, 96
      %v549 = vpop.permute.xlu0 %548
      %vm550 = vcmask 130048
      %v552 = vsel %vm550, %v545, 0
      %v555 = vsel %vm550, %v549, 0
      %557 = vmatprep.subr.bf16.mxu0 0
      %558 = vmatpush1.bf16.xpose.msra.mxu0 %v555
      %559 = vmatprep.subr.bf16.mxu0 0
      %560 = vmatpush1.bf16.xpose.msra.mxu0 0
      %561 = vmatprep.subr.bf16.mxu0 0
      %562 = vmatpush1.bf16.xpose.msra.mxu0 0
      %563 = vmatprep.subr.bf16.mxu0 0
      %564 = vmatpush1.bf16.xpose.msra.mxu0 0
      %565 = vmatprep.subr.bf16.mxu0 0
      %566 = vmatpush1.bf16.xpose.msra.mxu0 0
      %567 = vmatprep.subr.bf16.mxu0 0
      %568 = vmatpush1.bf16.xpose.msra.mxu0 0
      %569 = vmatprep.subr.bf16.mxu0 0
      %570 = vmatpush1.bf16.xpose.msra.mxu0 0
      %571 = vmatprep.subr.bf16.mxu0 0
      %572 = vmatpush1.bf16.xpose.msra.mxu0 0
      %573 = vmatprep.subr.bf16.mxu0 0
      %574 = vmatpush1.bf16.xpose.msra.mxu0 0
      %575 = vmatprep.subr.bf16.mxu0 0
      %576 = vmatpush1.bf16.xpose.msra.mxu0 0
      %577 = vmatprep.subr.bf16.mxu0 0
      %578 = vmatpush1.bf16.xpose.msra.mxu0 0
      %579 = vmatprep.subr.bf16.mxu0 0
      %580 = vmatpush1.bf16.xpose.msra.mxu0 0
      %581 = vmatprep.subr.bf16.mxu0 0
      %582 = vmatpush1.bf16.xpose.msra.mxu0 0
      %583 = vmatprep.subr.bf16.mxu0 0
      %584 = vmatpush1.bf16.xpose.msra.mxu0 0
      %585 = vmatprep.subr.bf16.mxu0 0
      %586 = vmatpush1.bf16.xpose.msra.mxu0 0
      %587 = vmatprep.subr.bf16.mxu0 0
      %588 = vmatpush1.bf16.xpose.msra.mxu0 0
      %589 = vmatprep.mubr.bf16.mxu0 0
      %590 = vmatmul.mubr.bf16.gmra.mrb[0].mxu0 %v552
      %v591 = vpop.f32.mrb[0].mxu0
      %v592 = vadd.f32 0.0, %v591
      %v593 = vpop.f32.mrb[0].mxu0
      %v594 = vpop.f32.mrb[0].mxu0
      %v595 = vpop.f32.mrb[0].mxu0
      %596 = vdwg.mxu0
      %598 = vrot.lane.b32.xlu0 %v546, 96
      %v599 = vpop.permute.xlu0 %598
      %v601 = vsel %vm550, %v546, 0
      %v604 = vsel %vm550, %v599, 0
      %606 = vmatprep.subr.bf16.mxu0 0
      %607 = vmatpush1.bf16.xpose.msra.mxu0 %v604
      %608 = vmatprep.subr.bf16.mxu0 0
      %609 = vmatpush1.bf16.xpose.msra.mxu0 0
      %610 = vmatprep.subr.bf16.mxu0 0
      %611 = vmatpush1.bf16.xpose.msra.mxu0 0
      %612 = vmatprep.subr.bf16.mxu0 0
      %613 = vmatpush1.bf16.xpose.msra.mxu0 0
      %614 = vmatprep.subr.bf16.mxu0 0
      %615 = vmatpush1.bf16.xpose.msra.mxu0 0
      %616 = vmatprep.subr.bf16.mxu0 0
      %617 = vmatpush1.bf16.xpose.msra.mxu0 0
      %618 = vmatprep.subr.bf16.mxu0 0
      %619 = vmatpush1.bf16.xpose.msra.mxu0 0
      %620 = vmatprep.subr.bf16.mxu0 0
      %621 = vmatpush1.bf16.xpose.msra.mxu0 0
      %622 = vmatprep.subr.bf16.mxu0 0
      %623 = vmatpush1.bf16.xpose.msra.mxu0 0
      %624 = vmatprep.subr.bf16.mxu0 0
      %625 = vmatpush1.bf16.xpose.msra.mxu0 0
      %626 = vmatprep.subr.bf16.mxu0 0
      %627 = vmatpush1.bf16.xpose.msra.mxu0 0
      %628 = vmatprep.subr.bf16.mxu0 0
      %629 = vmatpush1.bf16.xpose.msra.mxu0 0
      %630 = vmatprep.subr.bf16.mxu0 0
      %631 = vmatpush1.bf16.xpose.msra.mxu0 0
      %632 = vmatprep.subr.bf16.mxu0 0
      %633 = vmatpush1.bf16.xpose.msra.mxu0 0
      %634 = vmatprep.subr.bf16.mxu0 0
      %635 = vmatpush1.bf16.xpose.msra.mxu0 0
      %636 = vmatprep.subr.bf16.mxu0 0
      %637 = vmatpush1.bf16.xpose.msra.mxu0 0
      %638 = vmatprep.mubr.bf16.mxu0 0
      %639 = vmatmul.mubr.bf16.gmra.mrb[0].mxu0 %v601
      %v640 = vpop.f32.mrb[0].mxu0
      %v641 = vadd.f32 0.0, %v640
      %v642 = vpop.f32.mrb[0].mxu0
      %v643 = vpop.f32.mrb[0].mxu0
      %v644 = vpop.f32.mrb[0].mxu0
      %645 = vdwg.mxu0
      %v646 = vsel %vm543, 1, 0
      %v647 = vsel %vm544, 1, 0
      %v648 = vlaneseq
      %v649 = vshrl.u32 %v648, 7
      %v650 = vsub.s32 0, %v649
      %v651 = vrot.slane %v646, %v650
      %v652 = vlaneseq
      %v653 = vshrl.u32 %v652, 7
      %v654 = vsub.s32 0, %v653
      %v655 = vrot.slane %v647, %v654
      %vm656 = vcmp.eq.s32.totalorder %v651, 1
      %vm657 = vcmp.eq.s32.totalorder %v655, 1
      %v658 = vsel %vm656, %v592, -1e+30
      %v659 = vsel %vm657, %v641, -1e+30
      %vm660 = vcmask 64512
      %v661 = vsel %vm660, %v658, -inf
      %662 = vmax.xlane.f32.xlu0 %v661
      %v663 = vpop.xlane.xlu0 %662
      %v664 = vsel %vm660, %v659, -inf
      %665 = vmax.xlane.f32.xlu0 %v664
      %v666 = vpop.xlane.xlu0 %665
      %v667 = vsub.f32 %v658, %v663
      %v668 = vsub.f32 %v659, %v666
      %v669 = vmul.f32 %v667, 1.442695
      %v670 = vpow.pop %v669
      %v671 = vmul.f32 %v668, 1.442695
      %v672 = vpow.pop %v671
      %v673 = vsel %vm660, %v670, 0.0
      %674 = vadd.xlane.f32.xlu0 %v673
      %v675 = vpop.xlane.xlu0 %674
      %v676 = vsel %vm660, %v672, 0.0
      %677 = vadd.xlane.f32.xlu0 %v676
      %v678 = vpop.xlane.xlu0 %677
      %v679 = vrcp.pop %v675
      %v680 = vrcp.pop %v678
      %v681 = vmul.f32 %v670, %v679
      %v682 = vmul.f32 %v672, %v680
      %v683 = vpack.c.bf16 %v681, %v681
      %v684 = vpack.c.bf16 %v682, %v682
      %685 = vrot.lane.b32.xlu0 %v545, 64
      %v686 = vpop.permute.xlu0 %685
      %v688 = vsel %vm660, %v683, 0
      %vm690 = vcmask 1043456
      %v692 = vsel %vm690, %v686, 0
      %694 = vmatprep.subr.bf16.mxu0 0
      %695 = vmatpush1.bf16.msra.mxu0 %v692
      %696 = vmatprep.subr.bf16.mxu0 0
      %697 = vmatpush1.bf16.msra.mxu0 0
      %698 = vmatprep.subr.bf16.mxu0 0
      %699 = vmatpush1.bf16.msra.mxu0 0
      %700 = vmatprep.subr.bf16.mxu0 0
      %701 = vmatpush1.bf16.msra.mxu0 0
      %702 = vmatprep.subr.bf16.mxu0 0
      %703 = vmatpush1.bf16.msra.mxu0 0
      %704 = vmatprep.subr.bf16.mxu0 0
      %705 = vmatpush1.bf16.msra.mxu0 0
      %706 = vmatprep.subr.bf16.mxu0 0
      %707 = vmatpush1.bf16.msra.mxu0 0
      %708 = vmatprep.subr.bf16.mxu0 0
      %709 = vmatpush1.bf16.msra.mxu0 0
      %710 = vmatprep.subr.bf16.mxu0 0
      %711 = vmatpush1.bf16.msra.mxu0 0
      %712 = vmatprep.subr.bf16.mxu0 0
      %713 = vmatpush1.bf16.msra.mxu0 0
      %714 = vmatprep.subr.bf16.mxu0 0
      %715 = vmatpush1.bf16.msra.mxu0 0
      %716 = vmatprep.subr.bf16.mxu0 0
      %717 = vmatpush1.bf16.msra.mxu0 0
      %718 = vmatprep.subr.bf16.mxu0 0
      %719 = vmatpush1.bf16.msra.mxu0 0
      %720 = vmatprep.subr.bf16.mxu0 0
      %721 = vmatpush1.bf16.msra.mxu0 0
      %722 = vmatprep.subr.bf16.mxu0 0
      %723 = vmatpush1.bf16.msra.mxu0 0
      %724 = vmatprep.subr.bf16.mxu0 0
      %725 = vmatpush1.bf16.msra.mxu0 0
      %726 = vmatprep.mubr.bf16.mxu0 0
      %727 = vmatmul.mubr.bf16.gmra.mrb[0].mxu0 %v688
      %v728 = vpop.f32.mrb[0].mxu0
      %v729 = vadd.f32 0.0, %v728
      %v730 = vpop.f32.mrb[0].mxu0
      %v731 = vpop.f32.mrb[0].mxu0
      %v732 = vpop.f32.mrb[0].mxu0
      %733 = vdwg.mxu0
      %734 = vrot.lane.b32.xlu0 %v546, 64
      %v735 = vpop.permute.xlu0 %734
      %v737 = vsel %vm660, %v684, 0
      %v740 = vsel %vm690, %v735, 0
      %742 = vmatprep.subr.bf16.mxu0 0
      %743 = vmatpush1.bf16.msra.mxu0 %v740
      %744 = vmatprep.subr.bf16.mxu0 0
      %745 = vmatpush1.bf16.msra.mxu0 0
      %746 = vmatprep.subr.bf16.mxu0 0
      %747 = vmatpush1.bf16.msra.mxu0 0
      %748 = vmatprep.subr.bf16.mxu0 0
      %749 = vmatpush1.bf16.msra.mxu0 0
      %750 = vmatprep.subr.bf16.mxu0 0
      %751 = vmatpush1.bf16.msra.mxu0 0
      %752 = vmatprep.subr.bf16.mxu0 0
      %753 = vmatpush1.bf16.msra.mxu0 0
      %754 = vmatprep.subr.bf16.mxu0 0
      %755 = vmatpush1.bf16.msra.mxu0 0
      %756 = vmatprep.subr.bf16.mxu0 0
      %757 = vmatpush1.bf16.msra.mxu0 0
      %758 = vmatprep.subr.bf16.mxu0 0
      %759 = vmatpush1.bf16.msra.mxu0 0
      %760 = vmatprep.subr.bf16.mxu0 0
      %761 = vmatpush1.bf16.msra.mxu0 0
      %762 = vmatprep.subr.bf16.mxu0 0
      %763 = vmatpush1.bf16.msra.mxu0 0
      %764 = vmatprep.subr.bf16.mxu0 0
      %765 = vmatpush1.bf16.msra.mxu0 0
      %766 = vmatprep.subr.bf16.mxu0 0
      %767 = vmatpush1.bf16.msra.mxu0 0
      %768 = vmatprep.subr.bf16.mxu0 0
      %769 = vmatpush1.bf16.msra.mxu0 0
      %770 = vmatprep.subr.bf16.mxu0 0
      %771 = vmatpush1.bf16.msra.mxu0 0
      %772 = vmatprep.subr.bf16.mxu0 0
      %773 = vmatpush1.bf16.msra.mxu0 0
      %774 = vmatprep.mubr.bf16.mxu0 0
      %775 = vmatmul.mubr.bf16.gmra.mrb[0].mxu0 %v737
      %v776 = vpop.f32.mrb[0].mxu0
      %v777 = vadd.f32 0.0, %v776
      %v778 = vpop.f32.mrb[0].mxu0
      %v779 = vpop.f32.mrb[0].mxu0
      %v780 = vpop.f32.mrb[0].mxu0
      %781 = vdwg.mxu0
      %782 = vrot.lane.b32.xlu0 %v545, 112
      %v783 = vpop.permute.xlu0 %782
      %784 = vrot.lane.b32.xlu0 %v545, 80
      %v785 = vpop.permute.xlu0 %784
      %v787 = vsel %vm550, %v783, 0
      %v790 = vsel %vm550, %v785, 0
      %792 = vmatprep.subr.bf16.mxu0 0
      %793 = vmatpush1.bf16.xpose.msra.mxu0 %v790
      %794 = vmatprep.subr.bf16.mxu0 0
      %795 = vmatpush1.bf16.xpose.msra.mxu0 0
      %796 = vmatprep.subr.bf16.mxu0 0
      %797 = vmatpush1.bf16.xpose.msra.mxu0 0
      %798 = vmatprep.subr.bf16.mxu0 0
      %799 = vmatpush1.bf16.xpose.msra.mxu0 0
      %800 = vmatprep.subr.bf16.mxu0 0
      %801 = vmatpush1.bf16.xpose.msra.mxu0 0
      %802 = vmatprep.subr.bf16.mxu0 0
      %803 = vmatpush1.bf16.xpose.msra.mxu0 0
      %804 = vmatprep.subr.bf16.mxu0 0
      %805 = vmatpush1.bf16.xpose.msra.mxu0 0
      %806 = vmatprep.subr.bf16.mxu0 0
      %807 = vmatpush1.bf16.xpose.msra.mxu0 0
      %808 = vmatprep.subr.bf16.mxu0 0
      %809 = vmatpush1.bf16.xpose.msra.mxu0 0
      %810 = vmatprep.subr.bf16.mxu0 0
      %811 = vmatpush1.bf16.xpose.msra.mxu0 0
      %812 = vmatprep.subr.bf16.mxu0 0
      %813 = vmatpush1.bf16.xpose.msra.mxu0 0
      %814 = vmatprep.subr.bf16.mxu0 0
      %815 = vmatpush1.bf16.xpose.msra.mxu0 0
      %816 = vmatprep.subr.bf16.mxu0 0
      %817 = vmatpush1.bf16.xpose.msra.mxu0 0
      %818 = vmatprep.subr.bf16.mxu0 0
      %819 = vmatpush1.bf16.xpose.msra.mxu0 0
      %820 = vmatprep.subr.bf16.mxu0 0
      %821 = vmatpush1.bf16.xpose.msra.mxu0 0
      %822 = vmatprep.subr.bf16.mxu0 0
      %823 = vmatpush1.bf16.xpose.msra.mxu0 0
      %824 = vmatprep.mubr.bf16.mxu0 0
      %825 = vmatmul.mubr.bf16.gmra.mrb[0].mxu0 %v787
      %v826 = vpop.f32.mrb[0].mxu0
      %v827 = vadd.f32 0.0, %v826
      %v828 = vpop.f32.mrb[0].mxu0
      %v829 = vpop.f32.mrb[0].mxu0
      %v830 = vpop.f32.mrb[0].mxu0
      %831 = vdwg.mxu0
      %832 = vrot.lane.b32.xlu0 %v546, 112
      %v833 = vpop.permute.xlu0 %832
      %834 = vrot.lane.b32.xlu0 %v546, 80
      %v835 = vpop.permute.xlu0 %834
      %v837 = vsel %vm550, %v833, 0
      %v840 = vsel %vm550, %v835, 0
      %842 = vmatprep.subr.bf16.mxu0 0
      %843 = vmatpush1.bf16.xpose.msra.mxu0 %v840
      %844 = vmatprep.subr.bf16.mxu0 0
      %845 = vmatpush1.bf16.xpose.msra.mxu0 0
      %846 = vmatprep.subr.bf16.mxu0 0
      %847 = vmatpush1.bf16.xpose.msra.mxu0 0
      %848 = vmatprep.subr.bf16.mxu0 0
      %849 = vmatpush1.bf16.xpose.msra.mxu0 0
      %850 = vmatprep.subr.bf16.mxu0 0
      %851 = vmatpush1.bf16.xpose.msra.mxu0 0
      %852 = vmatprep.subr.bf16.mxu0 0
      %853 = vmatpush1.bf16.xpose.msra.mxu0 0
      %854 = vmatprep.subr.bf16.mxu0 0
      %855 = vmatpush1.bf16.xpose.msra.mxu0 0
      %856 = vmatprep.subr.bf16.mxu0 0
      %857 = vmatpush1.bf16.xpose.msra.mxu0 0
      %858 = vmatprep.subr.bf16.mxu0 0
      %859 = vmatpush1.bf16.xpose.msra.mxu0 0
      %860 = vmatprep.subr.bf16.mxu0 0
      %861 = vmatpush1.bf16.xpose.msra.mxu0 0
      %862 = vmatprep.subr.bf16.mxu0 0
      %863 = vmatpush1.bf16.xpose.msra.mxu0 0
      %864 = vmatprep.subr.bf16.mxu0 0
      %865 = vmatpush1.bf16.xpose.msra.mxu0 0
      %866 = vmatprep.subr.bf16.mxu0 0
      %867 = vmatpush1.bf16.xpose.msra.mxu0 0
      %868 = vmatprep.subr.bf16.mxu0 0
      %869 = vmatpush1.bf16.xpose.msra.mxu0 0
      %870 = vmatprep.subr.bf16.mxu0 0
      %871 = vmatpush1.bf16.xpose.msra.mxu0 0
      %872 = vmatprep.subr.bf16.mxu0 0
      %873 = vmatpush1.bf16.xpose.msra.mxu0 0
      %874 = vmatprep.mubr.bf16.mxu0 0
      %875 = vmatmul.mubr.bf16.gmra.mrb[0].mxu0 %v837
      %v876 = vpop.f32.mrb[0].mxu0
      %v877 = vadd.f32 0.0, %v876
      %v878 = vpop.f32.mrb[0].mxu0
      %v879 = vpop.f32.mrb[0].mxu0
      %v880 = vpop.f32.mrb[0].mxu0
      %881 = vdwg.mxu0
      %v882 = vsel %vm656, %v827, -1e+30
      %v883 = vsel %vm657, %v877, -1e+30
      %v884 = vsel %vm660, %v882, -inf
      %885 = vmax.xlane.f32.xlu0 %v884
      %v886 = vpop.xlane.xlu0 %885
      %v887 = vsel %vm660, %v883, -inf
      %888 = vmax.xlane.f32.xlu0 %v887
      %v889 = vpop.xlane.xlu0 %888
      %v890 = vsub.f32 %v882, %v886
      %v891 = vsub.f32 %v883, %v889
      %v892 = vmul.f32 %v890, 1.442695
      %v893 = vpow.pop %v892
      %v894 = vmul.f32 %v891, 1.442695
      %v895 = vpow.pop %v894
      %v896 = vsel %vm660, %v893, 0.0
      %897 = vadd.xlane.f32.xlu0 %v896
      %v898 = vpop.xlane.xlu0 %897
      %v899 = vsel %vm660, %v895, 0.0
      %900 = vadd.xlane.f32.xlu0 %v899
      %v901 = vpop.xlane.xlu0 %900
      %v902 = vrcp.pop %v898
      %v903 = vrcp.pop %v901
      %v904 = vmul.f32 %v893, %v902
      %v905 = vmul.f32 %v895, %v903
      %v906 = vpack.c.bf16 %v904, %v904
      %v907 = vpack.c.bf16 %v905, %v905
      %908 = vrot.lane.b32.xlu0 %v545, 48
      %v909 = vpop.permute.xlu0 %908
      %v911 = vsel %vm660, %v906, 0
      %v914 = vsel %vm690, %v909, 0
      %916 = vmatprep.subr.bf16.mxu0 0
      %917 = vmatpush1.bf16.msra.mxu0 %v914
      %918 = vmatprep.subr.bf16.mxu0 0
      %919 = vmatpush1.bf16.msra.mxu0 0
      %920 = vmatprep.subr.bf16.mxu0 0
      %921 = vmatpush1.bf16.msra.mxu0 0
      %922 = vmatprep.subr.bf16.mxu0 0
      %923 = vmatpush1.bf16.msra.mxu0 0
      %924 = vmatprep.subr.bf16.mxu0 0
      %925 = vmatpush1.bf16.msra.mxu0 0
      %926 = vmatprep.subr.bf16.mxu0 0
      %927 = vmatpush1.bf16.msra.mxu0 0
      %928 = vmatprep.subr.bf16.mxu0 0
      %929 = vmatpush1.bf16.msra.mxu0 0
      %930 = vmatprep.subr.bf16.mxu0 0
      %931 = vmatpush1.bf16.msra.mxu0 0
      %932 = vmatprep.subr.bf16.mxu0 0
      %933 = vmatpush1.bf16.msra.mxu0 0
      %934 = vmatprep.subr.bf16.mxu0 0
      %935 = vmatpush1.bf16.msra.mxu0 0
      %936 = vmatprep.subr.bf16.mxu0 0
      %937 = vmatpush1.bf16.msra.mxu0 0
      %938 = vmatprep.subr.bf16.mxu0 0
      %939 = vmatpush1.bf16.msra.mxu0 0
      %940 = vmatprep.subr.bf16.mxu0 0
      %941 = vmatpush1.bf16.msra.mxu0 0
      %942 = vmatprep.subr.bf16.mxu0 0
      %943 = vmatpush1.bf16.msra.mxu0 0
      %944 = vmatprep.subr.bf16.mxu0 0
      %945 = vmatpush1.bf16.msra.mxu0 0
      %946 = vmatprep.subr.bf16.mxu0 0
      %947 = vmatpush1.bf16.msra.mxu0 0
      %948 = vmatprep.mubr.bf16.mxu0 0
      %949 = vmatmul.mubr.bf16.gmra.mrb[0].mxu0 %v911
      %v950 = vpop.f32.mrb[0].mxu0
      %v951 = vadd.f32 0.0, %v950
      %v952 = vpop.f32.mrb[0].mxu0
      %v953 = vpop.f32.mrb[0].mxu0
      %v954 = vpop.f32.mrb[0].mxu0
      %955 = vdwg.mxu0
      %956 = vrot.lane.b32.xlu0 %v546, 48
      %v957 = vpop.permute.xlu0 %956
      %v959 = vsel %vm660, %v907, 0
      %v962 = vsel %vm690, %v957, 0
      %964 = vmatprep.subr.bf16.mxu0 0
      %965 = vmatpush1.bf16.msra.mxu0 %v962
      %966 = vmatprep.subr.bf16.mxu0 0
      %967 = vmatpush1.bf16.msra.mxu0 0
      %968 = vmatprep.subr.bf16.mxu0 0
      %969 = vmatpush1.bf16.msra.mxu0 0
      %970 = vmatprep.subr.bf16.mxu0 0
      %971 = vmatpush1.bf16.msra.mxu0 0
      %972 = vmatprep.subr.bf16.mxu0 0
      %973 = vmatpush1.bf16.msra.mxu0 0
      %974 = vmatprep.subr.bf16.mxu0 0
      %975 = vmatpush1.bf16.msra.mxu0 0
      %976 = vmatprep.subr.bf16.mxu0 0
      %977 = vmatpush1.bf16.msra.mxu0 0
      %978 = vmatprep.subr.bf16.mxu0 0
      %979 = vmatpush1.bf16.msra.mxu0 0
      %980 = vmatprep.subr.bf16.mxu0 0
      %981 = vmatpush1.bf16.msra.mxu0 0
      %982 = vmatprep.subr.bf16.mxu0 0
      %983 = vmatpush1.bf16.msra.mxu0 0
      %984 = vmatprep.subr.bf16.mxu0 0
      %985 = vmatpush1.bf16.msra.mxu0 0
      %986 = vmatprep.subr.bf16.mxu0 0
      %987 = vmatpush1.bf16.msra.mxu0 0
      %988 = vmatprep.subr.bf16.mxu0 0
      %989 = vmatpush1.bf16.msra.mxu0 0
      %990 = vmatprep.subr.bf16.mxu0 0
      %991 = vmatpush1.bf16.msra.mxu0 0
      %992 = vmatprep.subr.bf16.mxu0 0
      %993 = vmatpush1.bf16.msra.mxu0 0
      %994 = vmatprep.subr.bf16.mxu0 0
      %995 = vmatpush1.bf16.msra.mxu0 0
      %996 = vmatprep.mubr.bf16.mxu0 0
      %997 = vmatmul.mubr.bf16.gmra.mrb[0].mxu0 %v959
      %v998 = vpop.f32.mrb[0].mxu0
      %v999 = vadd.f32 0.0, %v998
      %v1000 = vpop.f32.mrb[0].mxu0
      %v1001 = vpop.f32.mrb[0].mxu0
      %v1002 = vpop.f32.mrb[0].mxu0
      %1003 = vdwg.mxu0
      %1006 = vrot.lane.b32.xlu0 %v951, 16
      %v1007 = vpop.permute.xlu0 %1006
      %1008 = vrot.lane.b32.xlu0 %v999, 16
      %v1009 = vpop.permute.xlu0 %1008
      %v1012 = vsel %vm550, %v729, %v1007
      %v1013 = vsel %vm550, %v777, %v1009
      %v1014 = vpack.c.bf16 %v1013, %v1012
      %v1015 = vld [vmem:[%s407] sm:$0xf]
      %v1016 = vld [vmem:[%s407 + $0x4] sm:$0xf]
      %v1017 = vld [vmem:[%s407 + $0x8] sm:$0xf]
      %v1018 = vld [vmem:[%s407 + $0xc] sm:$0xf]
      %v1019 = vlaneseq
      %v1020 = vshrl.u32 %v1019, 7
      %v1021 = vsub.s32 1, %v1020
      %v1022 = vrot.slane %v474, %v1021
      %v1027 = vunpack.c.l.b16 %v1015
      %v1028 = vunpack.c.l.b16 %v1016
      %v1029 = vunpack.c.l.b16 %v1017
      %v1030 = vunpack.c.l.b16 %v1018
      %v1031 = vpack.c.b16 %v1028, %v1027
      %v1032 = vpack.c.b16 %v1030, %v1029
      %v1036 = vsel %vm496, %v1014, 0
      %1038 = vmatprep.subr.bf16.mxu0 0
      %1039 = vmatpush1.bf16.msra.mxu0 %v1031
      %1040 = vmatprep.subr.bf16.mxu0 0
      %1041 = vmatpush1.bf16.msra.mxu0 %v1032
      %1042 = vmatprep.subr.bf16.mxu0 0
      %1043 = vmatpush1.bf16.msra.mxu0 0
      %1044 = vmatprep.subr.bf16.mxu0 0
      %1045 = vmatpush1.bf16.msra.mxu0 0
      %1046 = vmatprep.subr.bf16.mxu0 0
      %1047 = vmatpush1.bf16.msra.mxu0 0
      %1048 = vmatprep.subr.bf16.mxu0 0
      %1049 = vmatpush1.bf16.msra.mxu0 0
      %1050 = vmatprep.subr.bf16.mxu0 0
      %1051 = vmatpush1.bf16.msra.mxu0 0
      %1052 = vmatprep.subr.bf16.mxu0 0
      %1053 = vmatpush1.bf16.msra.mxu0 0
      %1054 = vmatprep.subr.bf16.mxu0 0
      %1055 = vmatpush1.bf16.msra.mxu0 0
      %1056 = vmatprep.subr.bf16.mxu0 0
      %1057 = vmatpush1.bf16.msra.mxu0 0
      %1058 = vmatprep.subr.bf16.mxu0 0
      %1059 = vmatpush1.bf16.msra.mxu0 0
      %1060 = vmatprep.subr.bf16.mxu0 0
      %1061 = vmatpush1.bf16.msra.mxu0 0
      %1062 = vmatprep.subr.bf16.mxu0 0
      %1063 = vmatpush1.bf16.msra.mxu0 0
      %1064 = vmatprep.subr.bf16.mxu0 0
      %1065 = vmatpush1.bf16.msra.mxu0 0
      %1066 = vmatprep.subr.bf16.mxu0 0
      %1067 = vmatpush1.bf16.msra.mxu0 0
      %1068 = vmatprep.subr.bf16.mxu0 0
      %1069 = vmatpush1.bf16.msra.mxu0 0
      %1070 = vmatprep.mubr.bf16.mxu0 0
      %1071 = vmatmul.mubr.bf16.gmra.mrb[0].mxu0 %v1036
      %v1072 = vpop.f32.mrb[0].mxu0
      %v1073 = vadd.f32 %v1022, %v1072
      %v1074 = vpop.f32.mrb[0].mxu0
      %v1075 = vpop.f32.mrb[0].mxu0
      %v1076 = vadd.f32 %v1022, %v1075
      %v1077 = vpop.f32.mrb[0].mxu0
      %1078 = vdwg.mxu0
      %v1079 = vadd.f32 %v472, %v1073
      %v1080 = vadd.f32 %v473, %v1076
      %v1081 = vsel %vm496, %v1079, 0.0
      %1082 = vadd.xlane.f32.xlu0 %v1081
      %v1083 = vpop.xlane.xlu0 %1082
      %v1084 = vsel %vm496, %v1080, 0.0
      %1085 = vadd.xlane.f32.xlu0 %v1084
      %v1086 = vpop.xlane.xlu0 %1085
      %v1087 = vrcp.pop 32.0
      %v1088 = vmul.f32 %v1083, %v1087
      %v1089 = vmul.f32 %v1086, %v1087
      %v1090 = vsub.f32 %v1079, %v1088
      %v1091 = vsub.f32 %v1080, %v1089
      %v1092 = vmul.f32 %v1090, %v1090
      %v1093 = vmul.f32 %v1091, %v1091
      %v1094 = vsel %vm496, %v1092, 0.0
      %1095 = vadd.xlane.f32.xlu0 %v1094
      %v1096 = vpop.xlane.xlu0 %1095
      %v1097 = vsel %vm496, %v1093, 0.0
      %1098 = vadd.xlane.f32.xlu0 %v1097
      %v1099 = vpop.xlane.xlu0 %1098
      %v1100 = vmul.f32 %v1096, %v1087
      %v1101 = vmul.f32 %v1099, %v1087
      %v1102 = vadd.f32 %v1100, 1e-12
      %v1103 = vadd.f32 %v1101, 1e-12
      %v1104 = vrsqrt.pop %v1102
      %v1105 = vrsqrt.pop %v1103
      %v1106 = vmul.f32 %v1090, %v1104
      %v1107 = vmul.f32 %v1091, %v1105
      %1109 = vrot.lane.b32.xlu0 %v1022, 96
      %v1110 = vpop.permute.xlu0 %1109
      %v1112 = vmul.f32 %v1106, %v1110
      %v1113 = vmul.f32 %v1107, %v1110
      %1114 = vrot.lane.b32.xlu0 %v1022, 64
      %v1115 = vpop.permute.xlu0 %1114
      %v1117 = vadd.f32 %v1112, %v1115
      %v1118 = vadd.f32 %v1113, %v1115
      %v1119 = vpack.c.bf16 %v1118, %v1117
      %v1120 = vld [vmem:[%s412] sm:$0xf]
      %v1121 = vld [vmem:[%s412 + $0x4] sm:$0xf]
      %v1122 = vld [vmem:[%s412 + $0x8] sm:$0xf]
      %v1123 = vld [vmem:[%s412 + $0xc] sm:$0xf]
      %v1124 = vlaneseq
      %v1125 = vshrl.u32 %v1124, 7
      %v1126 = vsub.s32 2, %v1125
      %v1127 = vrot.slane %v474, %v1126
      %v1132 = vunpack.c.l.b16 %v1120
      %v1133 = vunpack.c.l.b16 %v1121
      %v1134 = vunpack.c.l.b16 %v1122
      %v1135 = vunpack.c.l.b16 %v1123
      %v1136 = vpack.c.b16 %v1133, %v1132
      %v1137 = vpack.c.b16 %v1135, %v1134
      %v1141 = vsel %vm496, %v1119, 0
      %1143 = vmatprep.subr.bf16.mxu0 0
      %1144 = vmatpush1.bf16.msra.mxu0 %v1136
      %1145 = vmatprep.subr.bf16.mxu0 0
      %1146 = vmatpush1.bf16.msra.mxu0 %v1137
      %1147 = vmatprep.subr.bf16.mxu0 0
      %1148 = vmatpush1.bf16.msra.mxu0 0
      %1149 = vmatprep.subr.bf16.mxu0 0
      %1150 = vmatpush1.bf16.msra.mxu0 0
      %1151 = vmatprep.subr.bf16.mxu0 0
      %1152 = vmatpush1.bf16.msra.mxu0 0
      %1153 = vmatprep.subr.bf16.mxu0 0
      %1154 = vmatpush1.bf16.msra.mxu0 0
      %1155 = vmatprep.subr.bf16.mxu0 0
      %1156 = vmatpush1.bf16.msra.mxu0 0
      %1157 = vmatprep.subr.bf16.mxu0 0
      %1158 = vmatpush1.bf16.msra.mxu0 0
      %1159 = vmatprep.subr.bf16.mxu0 0
      %1160 = vmatpush1.bf16.msra.mxu0 0
      %1161 = vmatprep.subr.bf16.mxu0 0
      %1162 = vmatpush1.bf16.msra.mxu0 0
      %1163 = vmatprep.subr.bf16.mxu0 0
      %1164 = vmatpush1.bf16.msra.mxu0 0
      %1165 = vmatprep.subr.bf16.mxu0 0
      %1166 = vmatpush1.bf16.msra.mxu0 0
      %1167 = vmatprep.subr.bf16.mxu0 0
      %1168 = vmatpush1.bf16.msra.mxu0 0
      %1169 = vmatprep.subr.bf16.mxu0 0
      %1170 = vmatpush1.bf16.msra.mxu0 0
      %1171 = vmatprep.subr.bf16.mxu0 0
      %1172 = vmatpush1.bf16.msra.mxu0 0
      %1173 = vmatprep.subr.bf16.mxu0 0
      %1174 = vmatpush1.bf16.msra.mxu0 0
      %1175 = vmatprep.mubr.bf16.mxu0 0
      %1176 = vmatmul.mubr.bf16.gmra.mrb[0].mxu0 %v1141
      %v1177 = vpop.f32.mrb[0].mxu0
      %v1178 = vadd.f32 %v1127, %v1177
      %v1179 = vpop.f32.mrb[0].mxu0
      %v1180 = vpop.f32.mrb[0].mxu0
      %v1181 = vadd.f32 %v1127, %v1180
      %v1182 = vpop.f32.mrb[0].mxu0
      %1183 = vdwg.mxu0
      %v1184 = vmul.f32 %v1178, %v1178
      %v1185 = vmul.f32 %v1181, %v1181
      %v1186 = vmul.f32 %v1178, %v1184
      %v1187 = vmul.f32 %v1181, %v1185
      %v1188 = vmul.f32 %v1186, 0.044715
      %v1189 = vmul.f32 %v1187, 0.044715
      %v1190 = vadd.f32 %v1178, %v1188
      %v1191 = vadd.f32 %v1181, %v1189
      %v1192 = vmul.f32 %v1190, 0.7978846
      %v1193 = vmul.f32 %v1191, 0.7978846
      %v1194 = vtanh.pop %v1192
      %v1195 = vtanh.pop %v1193
      %v1196 = vadd.f32 %v1194, 1.0
      %v1197 = vadd.f32 %v1195, 1.0
      %v1198 = vmul.f32 %v1196, 0.5
      %v1199 = vmul.f32 %v1197, 0.5
      %v1200 = vmul.f32 %v1178, %v1198
      %v1201 = vmul.f32 %v1181, %v1199
      %v1202 = vpack.c.bf16 %v1201, %v1200
      %v1203 = vld [vmem:[%s417] sm:$0xf]
      %v1204 = vld [vmem:[%s417 + $0x4] sm:$0xf]
      %v1205 = vld [vmem:[%s417 + $0x8] sm:$0xf]
      %v1206 = vld [vmem:[%s417 + $0xc] sm:$0xf]
      %v1207 = vld [vmem:[%s417 + $0x10] sm:$0xf]
      %v1208 = vld [vmem:[%s417 + $0x14] sm:$0xf]
      %v1209 = vld [vmem:[%s417 + $0x18] sm:$0xf]
      %v1210 = vld [vmem:[%s417 + $0x1c] sm:$0xf]
      %v1219 = vunpack.c.l.b16 %v1203
      %v1220 = vunpack.c.l.b16 %v1204
      %v1221 = vunpack.c.l.b16 %v1205
      %v1222 = vunpack.c.l.b16 %v1206
      %v1223 = vunpack.c.l.b16 %v1207
      %v1224 = vunpack.c.l.b16 %v1208
      %v1225 = vunpack.c.l.b16 %v1209
      %v1226 = vunpack.c.l.b16 %v1210
      %v1227 = vpack.c.b16 %v1220, %v1219
      %v1228 = vpack.c.b16 %v1222, %v1221
      %v1229 = vpack.c.b16 %v1224, %v1223
      %v1230 = vpack.c.b16 %v1226, %v1225
      %1236 = vrot.lane.b32.xlu0 %v1127, 64
      %v1237 = vpop.permute.xlu0 %1236
      %vm1239 = vcmask 523264
      %v1241 = vsel %vm1239, %v1202, 0
      %1243 = vmatprep.subr.bf16.mxu0 0
      %1244 = vmatpush1.bf16.msra.mxu0 %v1227
      %1245 = vmatprep.subr.bf16.mxu0 0
      %1246 = vmatpush1.bf16.msra.mxu0 %v1228
      %1247 = vmatprep.subr.bf16.mxu0 0
      %1248 = vmatpush1.bf16.msra.mxu0 %v1229
      %1249 = vmatprep.subr.bf16.mxu0 0
      %1250 = vmatpush1.bf16.msra.mxu0 %v1230
      %1251 = vmatprep.subr.bf16.mxu0 0
      %1252 = vmatpush1.bf16.msra.mxu0 0
      %1253 = vmatprep.subr.bf16.mxu0 0
      %1254 = vmatpush1.bf16.msra.mxu0 0
      %1255 = vmatprep.subr.bf16.mxu0 0
      %1256 = vmatpush1.bf16.msra.mxu0 0
      %1257 = vmatprep.subr.bf16.mxu0 0
      %1258 = vmatpush1.bf16.msra.mxu0 0
      %1259 = vmatprep.subr.bf16.mxu0 0
      %1260 = vmatpush1.bf16.msra.mxu0 0
      %1261 = vmatprep.subr.bf16.mxu0 0
      %1262 = vmatpush1.bf16.msra.mxu0 0
      %1263 = vmatprep.subr.bf16.mxu0 0
      %1264 = vmatpush1.bf16.msra.mxu0 0
      %1265 = vmatprep.subr.bf16.mxu0 0
      %1266 = vmatpush1.bf16.msra.mxu0 0
      %1267 = vmatprep.subr.bf16.mxu0 0
      %1268 = vmatpush1.bf16.msra.mxu0 0
      %1269 = vmatprep.subr.bf16.mxu0 0
      %1270 = vmatpush1.bf16.msra.mxu0 0
      %1271 = vmatprep.subr.bf16.mxu0 0
      %1272 = vmatpush1.bf16.msra.mxu0 0
      %1273 = vmatprep.subr.bf16.mxu0 0
      %1274 = vmatpush1.bf16.msra.mxu0 0
      %1275 = vmatprep.mubr.bf16.mxu0 0
      %1276 = vmatmul.mubr.bf16.gmra.mrb[0].mxu0 %v1241
      %v1277 = vpop.f32.mrb[0].mxu0
      %v1278 = vadd.f32 %v1237, %v1277
      %v1279 = vpop.f32.mrb[0].mxu0
      %v1280 = vpop.f32.mrb[0].mxu0
      %v1281 = vadd.f32 %v1237, %v1280
      %v1282 = vpop.f32.mrb[0].mxu0
      %1283 = vdwg.mxu0
      %v1284 = vadd.f32 %v1117, %v1278
      %v1285 = vadd.f32 %v1118, %v1281
      %v1286 = vsel %vm496, %v1284, 0.0
      %1287 = vadd.xlane.f32.xlu0 %v1286
      %v1288 = vpop.xlane.xlu0 %1287
      %v1289 = vsel %vm496, %v1285, 0.0
      %1290 = vadd.xlane.f32.xlu0 %v1289
      %v1291 = vpop.xlane.xlu0 %1290
      %v1292 = vmul.f32 %v1288, %v1087
      %v1293 = vmul.f32 %v1291, %v1087
      %v1294 = vsub.f32 %v1284, %v1292
      %v1295 = vsub.f32 %v1285, %v1293
      %v1296 = vmul.f32 %v1294, %v1294
      %v1297 = vmul.f32 %v1295, %v1295
      %v1298 = vsel %vm496, %v1296, 0.0
      %1299 = vadd.xlane.f32.xlu0 %v1298
      %v1300 = vpop.xlane.xlu0 %1299
      %v1301 = vsel %vm496, %v1297, 0.0
      %1302 = vadd.xlane.f32.xlu0 %v1301
      %v1303 = vpop.xlane.xlu0 %1302
      %v1304 = vmul.f32 %v1300, %v1087
      %v1305 = vmul.f32 %v1303, %v1087
      %v1306 = vadd.f32 %v1304, 1e-12
      %v1307 = vadd.f32 %v1305, 1e-12
      %v1308 = vrsqrt.pop %v1306
      %v1309 = vrsqrt.pop %v1307
      %v1310 = vmul.f32 %v1294, %v1308
      %v1311 = vmul.f32 %v1295, %v1309
      %v1312 = vlaneseq
      %v1313 = vshrl.u32 %v1312, 7
      %v1314 = vsub.s32 3, %v1313
      %v1315 = vrot.slane %v474, %v1314
      %v1316 = vmul.f32 %v1310, %v1315
      %v1317 = vmul.f32 %v1311, %v1315
      %1319 = vrot.lane.b32.xlu0 %v1315, 96
      %v1320 = vpop.permute.xlu0 %1319
      %v1322 = vadd.f32 %v1316, %v1320
      %v1323 = vadd.f32 %v1317, %v1320
      %1324 = vst.msk [vmem:[#allocation2] sm:$0xff] %vm496, %v1322
      %1325 = vst.msk [vmem:[#allocation2 + $0x8] sm:$0xff] %vm496, %v1323
      %p1326 = scmp.eq.s32.totalorder %s21, 1
      // Predicated region
      $region65: #{bert_backbone_forward.1} parent=59 // pred_check
        %p1327 = pneg %p1326
      $region66: #{bert_backbone_forward.1} parent=59 // pred_check_branch
        %1329 = sbr.rel (%p1327) target = $region68
      $region67: #{bert_backbone_forward.1} parent=59 // pred_region
        %v1330 = vld [vmem:[%s3] sm:$0x7]
        %v1331 = vpack.c.bf16 %v1322, %v1322
        %v1332 = vpack.c.bf16 %v1323, %v1323
        %v1333 = vld [vmem:[%s9] sm:$0xf]
        %v1334 = vld [vmem:[%s9 + $0x4] sm:$0xf]
        %v1335 = vld [vmem:[%s9 + $0x8] sm:$0xf]
        %v1336 = vld [vmem:[%s9 + $0xc] sm:$0xf]
        %v1337 = vlaneseq
        %v1338 = vshrl.u32 %v1337, 7
        %v1339 = vsub.s32 2, %v1338
        %v1340 = vrot.slane %v1330, %v1339
        %v1343 = vunpack.c.l.b16 %v1331
        %v1344 = vunpack.c.l.b16 %v1332
        %v1345 = vrot.slane %v1344, 7
        %vm1346 = vcmask 1041409
        %v1347 = vsel %vm1346, %v1345, %v1343
        %v1348 = vpack.c.b16 %v1347, %v1347
        %v1353 = vunpack.c.l.b16 %v1333
        %v1354 = vunpack.c.l.b16 %v1334
        %v1355 = vunpack.c.l.b16 %v1335
        %v1356 = vunpack.c.l.b16 %v1336
        %v1357 = vpack.c.b16 %v1354, %v1353
        %v1358 = vpack.c.b16 %v1356, %v1355
        %v1362 = vsel %vm496, %v1348, 0
        %1364 = vmatprep.subr.bf16.mxu0 0
        %1365 = vmatpush1.bf16.msra.mxu0 %v1357
        %1366 = vmatprep.subr.bf16.mxu0 0
        %1367 = vmatpush1.bf16.msra.mxu0 %v1358
        %1368 = vmatprep.subr.bf16.mxu0 0
        %1369 = vmatpush1.bf16.msra.mxu0 0
        %1370 = vmatprep.subr.bf16.mxu0 0
        %1371 = vmatpush1.bf16.msra.mxu0 0
        %1372 = vmatprep.subr.bf16.mxu0 0
        %1373 = vmatpush1.bf16.msra.mxu0 0
        %1374 = vmatprep.subr.bf16.mxu0 0
        %1375 = vmatpush1.bf16.msra.mxu0 0
        %1376 = vmatprep.subr.bf16.mxu0 0
        %1377 = vmatpush1.bf16.msra.mxu0 0
        %1378 = vmatprep.subr.bf16.mxu0 0
        %1379 = vmatpush1.bf16.msra.mxu0 0
        %1380 = vmatprep.subr.bf16.mxu0 0
        %1381 = vmatpush1.bf16.msra.mxu0 0
        %1382 = vmatprep.subr.bf16.mxu0 0
        %1383 = vmatpush1.bf16.msra.mxu0 0
        %1384 = vmatprep.subr.bf16.mxu0 0
        %1385 = vmatpush1.bf16.msra.mxu0 0
        %1386 = vmatprep.subr.bf16.mxu0 0
        %1387 = vmatpush1.bf16.msra.mxu0 0
        %1388 = vmatprep.subr.bf16.mxu0 0
        %1389 = vmatpush1.bf16.msra.mxu0 0
        %1390 = vmatprep.subr.bf16.mxu0 0
        %1391 = vmatpush1.bf16.msra.mxu0 0
        %1392 = vmatprep.subr.bf16.mxu0 0
        %1393 = vmatpush1.bf16.msra.mxu0 0
        %1394 = vmatprep.subr.bf16.mxu0 0
        %1395 = vmatpush1.bf16.msra.mxu0 0
        %1396 = vmatprep.mubr.bf16.mxu0 0
        %1397 = vmatmul.mubr.bf16.gmra.mrb[0].mxu0 %v1362
        %v1398 = vpop.f32.mrb[0].mxu0
        %v1399 = vadd.f32 %v1340, %v1398
        %v1400 = vpop.f32.mrb[0].mxu0
        %v1401 = vpop.f32.mrb[0].mxu0
        %v1402 = vpop.f32.mrb[0].mxu0
        %1403 = vdwg.mxu0
        %v1404 = vtanh.pop %v1399
        %v1405 = vld [vmem:[%s2] sm:$0xff]
        %v1406 = vld [vmem:[%s2 + $0x8] sm:$0xff]
        %1408 = vset.pattern.permute.xlu0 0
        %1409 = vperm.xlu0 %1408, %v1405
        %v1410 = vpop.permute.xlu0 %1409
        %1413 = vset.pattern.permute.xlu0 0
        %1414 = vperm.xlu0 %1413, %v1406
        %v1415 = vpop.permute.xlu0 %1414
        %v1417 = vmul.f32 %v1322, %v1410
        %v1418 = vmul.f32 %v1323, %v1415
        %v1419 = vsel %vm496, %v1417, 0.0
        %v1420 = vrot.slane %v1419, 4
        %v1421 = vadd.f32 %v1419, %v1420
        %v1422 = vrot.slane %v1421, 2
        %v1423 = vadd.f32 %v1421, %v1422
        %v1424 = vrot.slane %v1423, 1
        %v1425 = vadd.f32 %v1423, %v1424
        %v1426 = vsel %vm496, %v1418, 0.0
        %v1427 = vrot.slane %v1426, 4
        %v1428 = vadd.f32 %v1426, %v1427
        %v1429 = vrot.slane %v1428, 2
        %v1430 = vadd.f32 %v1428, %v1429
        %v1431 = vrot.slane %v1430, 1
        %v1432 = vadd.f32 %v1430, %v1431
        %vm1433 = vcmask 7168
        %v1434 = vsel %vm1433, %v1405, 0.0
        %v1435 = vrot.slane %v1434, 4
        %v1436 = vadd.f32 %v1434, %v1435
        %v1437 = vrot.slane %v1436, 2
        %v1438 = vadd.f32 %v1436, %v1437
        %v1439 = vrot.slane %v1438, 1
        %v1440 = vadd.f32 %v1438, %v1439
        %v1441 = vsel %vm1433, %v1406, 0.0
        %v1442 = vrot.slane %v1441, 4
        %v1443 = vadd.f32 %v1441, %v1442
        %v1444 = vrot.slane %v1443, 2
        %v1445 = vadd.f32 %v1443, %v1444
        %v1446 = vrot.slane %v1445, 1
        %v1447 = vadd.f32 %v1445, %v1446
        %v1448 = vmax.f32 %v1440, 1.0
        %v1449 = vmax.f32 %v1447, 1.0
        %v1450 = vrsqrt.pop %v1448
        %v1451 = vrsqrt.pop %v1449
        %1453 = vset.pattern.permute.xlu0 0
        %1454 = vperm.xlu0 %1453, %v1450
        %v1455 = vpop.permute.xlu0 %1454
        %1458 = vset.pattern.permute.xlu0 0
        %1459 = vperm.xlu0 %1458, %v1451
        %v1460 = vpop.permute.xlu0 %1459
        %v1462 = vmul.f32 %v1425, %v1455
        %v1463 = vmul.f32 %v1432, %v1460
        %1465 = vrot.lane.b32.xlu0 %v1462, 32
        %v1466 = vpop.permute.xlu0 %1465
        %v1469 = vrot.slane %v1404, 1
        %1470 = vrot.lane.b32.xlu0 %v1469, 64
        %v1471 = vpop.permute.xlu0 %1470
        %1474 = vrot.lane.b32.xlu0 %v1463, 96
        %v1475 = vpop.permute.xlu0 %1474
        %v1477 = vsel %vm496, %v1404, %v1466
        %v1478 = vsel %vm1239, %v1477, %v1471
        %vm1479 = vcmask 785408
        %v1480 = vsel %vm1479, %v1478, %v1475
        %1481 = vst [vmem:[%s10] sm:$0x1] %v1480
      $region68: #{bert_backbone_forward.1} parent=59 // pred_fallthru
        _
      // Predicated region
      $region69: #{bert_backbone_forward.1} parent=59 // pred_check
        %p1482 = pneg %p269
      $region70: #{bert_backbone_forward.1} parent=59 // pred_check_branch
        %1484 = sbr.rel (%p1482) target = $region72
      $region71: #{bert_backbone_forward.1} parent=59 // pred_region
        _
      $region72: #{bert_backbone_forward.1} parent=59 // pred_fallthru
        _
      // Predicated region
      $region73: #{bert_backbone_forward.1} parent=59 // pred_check
        %p1485 = pneg %p269
      $region74: #{bert_backbone_forward.1} parent=59 // pred_check_branch
        %1487 = sbr.rel (%p1485) target = $region76
      $region75: #{bert_backbone_forward.1} parent=59 // pred_region
        _
      $region76: #{bert_backbone_forward.1} parent=59 // pred_fallthru
        _
    $region60: #{bert_backbone_forward.1} parent=5 // pred_fallthru
      _
    %p1488 = scmp.le.s32.totalorder 2, %s16
    // Predicated region
    $region77: #{bert_backbone_forward.1} parent=5 // pred_check
      %p1489 = pneg %p1488
    $region78: #{bert_backbone_forward.1} parent=5 // pred_check_branch
      %1491 = sbr.rel (%p1489) target = $region80
    $region79: #{bert_backbone_forward.1} parent=5 // pred_region
      %s1492 = ssub.s32 %s16, 2
    $region80: #{bert_backbone_forward.1} parent=5 // pred_fallthru
      _
  $region6: #{bert_backbone_forward.1} parent=0 // loop_footer
    %s20 = sadd.s32 1, %s16
  $region7: #{bert_backbone_forward.1} parent=0 // loop_footer_branch
    %15 = sbr.rel target = $region3
  $region8: #{bert_backbone_forward.1} parent=0 // loop_exit
    _

</llo_original>
